<compile_context>
chip_gen: v5e
topology: v5e:2x2
jax: 0.10.0
libtpu: 0.0.40
codegen_flags: <defaults>
</compile_context>

<pallas_src>
import numpy as np
import jax
import jax.numpy as jnp
from jax import lax
from jax.experimental import pallas as pl
from jax.experimental.pallas import tpu as pltpu

D_CONV_1 = 8    # d_conv_1(distance)
D_CONV_2 = 12   # d_conv_2(distance)
D_FF = 20       # d_ff(distance)
EPS = 1e-5
HIGHEST = lax.Precision.HIGHEST   # reference path only


def _round_up(n, m):
    return ((n + m - 1) // m) * m


# ----------------------------------------------------------------------------
# ConvTranspose2d -> dense Toeplitz matrix over flattened NCHW features
# ----------------------------------------------------------------------------
def convT_out(h, k, s, p):
    return (h - 1) * s - 2 * p + k


def convT_toeplitz(w, cin, cout, groups, k, s, p, h_in, w_in):
    """w: PyTorch ConvTranspose2d weight, shape (cin, cout // groups, k, k).
    Returns M of shape (cin*h_in*w_in, cout*h_out*w_out), and h_out, w_out."""
    h_out = convT_out(h_in, k, s, p)
    w_out = convT_out(w_in, k, s, p)
    cin_g = cin // groups
    cout_g = cout // groups
    M = np.zeros((cin * h_in * w_in, cout * h_out * w_out), dtype=np.float32)
    for ci in range(cin):
        g = ci // cin_g
        for col in range(cout_g):
            co = g * cout_g + col
            for ih in range(h_in):
                for iw in range(w_in):
                    for kh in range(k):
                        oh = ih * s - p + kh
                        if oh < 0 or oh >= h_out:
                            continue
                        for kw in range(k):
                            ow = iw * s - p + kw
                            if ow < 0 or ow >= w_out:
                                continue
                            M[ci * h_in * w_in + ih * w_in + iw,
                              co * h_out * w_out + oh * w_out + ow] += w[ci, col, kh, kw]
    return M, h_out, w_out


# ----------------------------------------------------------------------------
# Deterministic parameter initialization (shapes from Decoder.__init__)
# ----------------------------------------------------------------------------
def init_params(key, latent_dims, distance, channels):
    s0 = int(0.25 * distance + 3 / 4)
    ki = iter(jax.random.split(key, 40))

    def nrm(shape, scale=0.2):
        return scale * jax.random.normal(next(ki), shape, dtype=jnp.float32)

    def bn(n):
        return dict(
            g=1.0 + 0.1 * jax.random.normal(next(ki), (n,), dtype=jnp.float32),
            b=0.1 * jax.random.normal(next(ki), (n,), dtype=jnp.float32),
            m=0.1 * jax.random.normal(next(ki), (n,), dtype=jnp.float32),
            v=0.5 + jax.random.uniform(next(ki), (n,), dtype=jnp.float32),
        )

    p = {}
    p["lin2_w"] = nrm((D_FF, latent_dims))
    p["lin2_b"] = nrm((D_FF,))
    p["bn4"] = bn(D_FF)
    f1 = D_CONV_2 * s0 * s0
    p["lin1_w"] = nrm((f1, D_FF))
    p["lin1_b"] = nrm((f1,))
    p["bn3"] = bn(f1)
    p["up1_w"] = nrm((D_CONV_2, 1, 4, 4))           # groups = D_CONV_2
    p["up1_b"] = nrm((D_CONV_2,))
    p["d22_w"] = nrm((D_CONV_2, D_CONV_2, 2, 2))
    p["d22_b"] = nrm((D_CONV_2,))
    p["d21_w"] = nrm((D_CONV_2, D_CONV_1, 3, 3))
    p["d21_b"] = nrm((D_CONV_1,))
    p["bn1"] = bn(D_CONV_1)
    p["up2_w"] = nrm((D_CONV_1, 1, 4, 4))           # groups = D_CONV_1
    p["up2_b"] = nrm((D_CONV_1,))
    p["d12_w"] = nrm((D_CONV_1, D_CONV_1, 2, 2))
    p["d12_b"] = nrm((D_CONV_1,))
    p["d11_w"] = nrm((D_CONV_1, channels, 3, 3))
    p["d11_b"] = nrm((channels,))
    return p


# ----------------------------------------------------------------------------
# Fold/fuse every layer into (w_hi, w_lo, shift, activation) on flat NCHW layout
#   - BN (eval) and dropout (identity) folded in; per-feature scale folded into M
#   - upsampling1 fused into deconv2_2; upsampling2 fused into deconv1_2
#   - all K/N padded to multiples of 128; weights split into bf16 hi/lo pair
# ----------------------------------------------------------------------------
def build_layers(p, distance, channels):
    s0 = int(0.25 * distance + 3 / 4)

    def bn_fold(bn):
        a = np.asarray(bn["g"]) / np.sqrt(np.asarray(bn["v"]) + EPS)
        return a, np.asarray(bn["b"]) - a * np.asarray(bn["m"])

    raw = []  # (M, shift, act) in float32 numpy, exact (unpadded) sizes

    # L1: linear2 (+dropout=identity) + bn4 + relu  (scale folded into M)
    a, c = bn_fold(p["bn4"])
    W = np.asarray(p["lin2_w"]).T * a[None, :]
    raw.append((W, a * np.asarray(p["lin2_b"]) + c, "relu"))

    # L2: linear1 + bn3 + relu  (scale folded into M)
    a, c = bn_fold(p["bn3"])
    W = np.asarray(p["lin1_w"]).T * a[None, :]
    raw.append((W, a * np.asarray(p["lin1_b"]) + c, "relu"))

    h = w = s0
    # L3: upsampling1 (depthwise ConvT k4 s2 p1, no act) fused into deconv2_2 (relu)
    M3, h, w = convT_toeplitz(np.asarray(p["up1_w"]), D_CONV_2, D_CONV_2,
                              D_CONV_2, 4, 2, 1, h, w)
    sh3 = np.repeat(np.asarray(p["up1_b"]), h * w)
    M4, h, w = convT_toeplitz(np.asarray(p["d22_w"]), D_CONV_2, D_CONV_2,
                              1, 2, 1, 1, h, w)
    sh4 = np.repeat(np.asarray(p["d22_b"]), h * w)
    raw.append((M3 @ M4, sh3 @ M4 + sh4, "relu"))

    # L4: deconv2_1 (ConvT k3 s1 p1) + bn1 + relu  (scale folded into M columns)
    M5, h, w = convT_toeplitz(np.asarray(p["d21_w"]), D_CONV_2, D_CONV_1,
                              1, 3, 1, 1, h, w)
    a, c = bn_fold(p["bn1"])
    sc = np.repeat(a, h * w)
    sh = np.repeat(a * np.asarray(p["d21_b"]) + c, h * w)
    raw.append((M5 * sc[None, :], sh, "relu"))

    # L5: upsampling2 (depthwise ConvT k4 s2 p1, no act) fused into deconv1_2 (relu)
    M6, h, w = convT_toeplitz(np.asarray(p["up2_w"]), D_CONV_1, D_CONV_1,
                              D_CONV_1, 4, 2, 1, h, w)
    sh6 = np.repeat(np.asarray(p["up2_b"]), h * w)
    M7, h, w = convT_toeplitz(np.asarray(p["d12_w"]), D_CONV_1, D_CONV_1,
                              1, 2, 1, 1, h, w)
    sh7 = np.repeat(np.asarray(p["d12_b"]), h * w)
    raw.append((M6 @ M7, sh6 @ M7 + sh7, "relu"))

    # L6: deconv1_1 (ConvT k3 s1 p1) + tanh
    M8, h, w = convT_toeplitz(np.asarray(p["d11_w"]), D_CONV_1, channels,
                              1, 3, 1, 1, h, w)
    raw.append((M8, np.repeat(np.asarray(p["d11_b"]), h * w), "tanh"))

    # Pad K/N to 128 multiples (zero rows/cols, zero shift -> exact chaining,
    # padded features stay 0 through relu/tanh) and split weights into bf16 hi/lo.
    layers = []
    k_pad = _round_up(raw[0][0].shape[0], 128)
    for M, sh, act in raw:
        K, N = M.shape
        n_pad = _round_up(N, 128)
        Mp = np.zeros((k_pad, n_pad), np.float32)
        Mp[:K, :N] = M
        shp = np.zeros((1, n_pad), np.float32)
        shp[0, :N] = sh
        Mj = jnp.asarray(Mp)
        w_hi = Mj.astype(jnp.bfloat16)
        w_lo = (Mj - w_hi.astype(jnp.float32)).astype(jnp.bfloat16)
        layers.append((w_hi, w_lo, jnp.asarray(shp), act))
        k_pad = n_pad
    return layers, raw[-1][0].shape[1], (channels, h, w)


# ----------------------------------------------------------------------------
# Pallas kernel: whole decoder chain; 6 layers, bf16x3 MXU matmuls, f32 elementwise
# ----------------------------------------------------------------------------
def decoder_forward(z, layers, out_dim, out_chw, *, tb=None):
    B, L = z.shape
    k0 = layers[0][0].shape[0]          # padded input width (>= latent_dims)
    n_last = layers[-1][0].shape[1]     # padded output width (multiple of 128)
    acts = tuple(l[3] for l in layers)

    # Batch tile: multiple of 8 sublanes; cap at 256 (MXU tile on v6e/v7x).
    if tb is None:
        tb = min(256, _round_up(B, 8))
    b_pad = _round_up(B, tb)
    zp = jnp.zeros((b_pad, k0), jnp.float32).at[:B, :L].set(z)

    inputs = [zp]
    in_specs = [pl.BlockSpec((tb, k0), lambda b: (b, 0))]
    for w_hi, w_lo, sh, _ in layers:
        inputs += [w_hi, w_lo, sh]
        in_specs += [
            pl.BlockSpec(w_hi.shape, lambda b: (0, 0)),   # VMEM-resident weights
            pl.BlockSpec(w_lo.shape, lambda b: (0, 0)),
            pl.BlockSpec(sh.shape, lambda b: (0, 0)),
        ]

    def kernel(*refs):
        out_ref = refs[-1]
        x = refs[0][...]
        for i, act in enumerate(acts):
            w_hi = refs[1 + 3 * i][...]
            w_lo = refs[2 + 3 * i][...]
            sh = refs[3 + 3 * i][...]
            # bf16x3 (Precision.HIGH equivalent): split x into hi/lo bf16 parts.
            x_hi = x.astype(jnp.bfloat16)
            x_lo = (x - x_hi.astype(jnp.float32)).astype(jnp.bfloat16)
            y = jnp.dot(x_hi, w_hi, preferred_element_type=jnp.float32)
            y = y + jnp.dot(x_lo, w_hi, preferred_element_type=jnp.float32)
            y = y + jnp.dot(x_hi, w_lo, preferred_element_type=jnp.float32)
            y = y + sh
            if act == "relu":
                y = jnp.maximum(y, 0.0)
            elif act == "tanh":
                y = jnp.tanh(y)
            x = y
        out_ref[...] = x

    flat = pl.pallas_call(
        kernel,
        out_shape=jax.ShapeDtypeStruct((b_pad, n_last), jnp.float32),
        grid=(b_pad // tb,),
        in_specs=in_specs,
        out_specs=pl.BlockSpec((tb, n_last), lambda b: (b, 0)),
        compiler_params=pltpu.CompilerParams(
            dimension_semantics=("parallel",)),
    )(*inputs)

    c, h, w = out_chw
    return flat[:B, :out_dim].reshape(B, c, h, w)


# ----------------------------------------------------------------------------
# Pure-JAX reference (independent path via lax.conv_general_dilated, f32 HIGHEST)
# ----------------------------------------------------------------------------
def _torch_convT_weight_to_lax(w, cin, cout, groups, k):
    w = np.asarray(w)
    cin_g, cout_g = cin // groups, cout // groups
    wt = np.zeros((cout, cin_g, k, k), dtype=np.float32)
    for gi in range(groups):
        for col in range(cout_g):
            for cil in range(cin_g):
                wt[gi * cout_g + col, cil] = w[gi * cin_g + cil, col, ::-1, ::-1]
    return jnp.asarray(wt)


def convT_ref(x, w, b, cin, cout, groups, k, s, p):
    wt = _torch_convT_weight_to_lax(w, cin, cout, groups, k)
    y = lax.conv_general_dilated(
        x, wt, window_strides=(1, 1),
        padding=[(k - 1 - p, k - 1 - p)] * 2,
        lhs_dilation=(s, s),
        dimension_numbers=("NCHW", "OIHW", "NCHW"),
        feature_group_count=groups,
        precision=HIGHEST)
    return y + b.reshape(1, -1, 1, 1)


def decoder_ref(z, p, distance, channels):
    s0 = int(0.25 * distance + 3 / 4)

    def bn1d(x, bn):
        return (x - bn["m"]) / jnp.sqrt(bn["v"] + EPS) * bn["g"] + bn["b"]

    def bn2d(x, bn):
        r = lambda v: v.reshape(1, -1, 1, 1)
        return (x - r(bn["m"])) / jnp.sqrt(r(bn["v"]) + EPS) * r(bn["g"]) + r(bn["b"])

    x = jnp.dot(z, p["lin2_w"].T, precision=HIGHEST) + p["lin2_b"]
    x = jnp.maximum(bn1d(x, p["bn4"]), 0.0)   # dropout = identity (eval)
    x = jnp.dot(x, p["lin1_w"].T, precision=HIGHEST) + p["lin1_b"]
    x = jnp.maximum(bn1d(x, p["bn3"]), 0.0)
    x = x.reshape(z.shape[0], D_CONV_2, s0, s0)
    x = convT_ref(x, p["up1_w"], p["up1_b"], D_CONV_2, D_CONV_2, D_CONV_2, 4, 2, 1)
    x = jnp.maximum(convT_ref(x, p["d22_w"], p["d22_b"], D_CONV_2, D_CONV_2, 1, 2, 1, 1), 0.0)
    x = convT_ref(x, p["d21_w"], p["d21_b"], D_CONV_2, D_CONV_1, 1, 3, 1, 1)
    x = jnp.maximum(bn2d(x, p["bn1"]), 0.0)
    x = convT_ref(x, p["up2_w"], p["up2_b"], D_CONV_1, D_CONV_1, D_CONV_1, 4, 2, 1)
    x = jnp.maximum(convT_ref(x, p["d12_w"], p["d12_b"], D_CONV_1, D_CONV_1, 1, 2, 1, 1), 0.0)
    x = jnp.tanh(convT_ref(x, p["d11_w"], p["d11_b"], D_CONV_1, channels, 1, 3, 1, 1))
    return x


if __name__ == "__main__":
    # Small, module-consistent shapes; batch=8 fills the MXU/vreg sublanes.
    latent_dims, distance, channels, batch = 8, 5, 2, 8
    key = jax.random.PRNGKey(0)
    kp, kz = jax.random.split(key)
    params = init_params(kp, latent_dims, distance, channels)
    z = jax.random.normal(kz, (batch, latent_dims), dtype=jnp.float32)

    layers, out_dim, out_chw = build_layers(params, distance, channels)
    out = jax.block_until_ready(decoder_forward(z, layers, out_dim, out_chw))

    ref = decoder_ref(z, params, distance, channels)
    assert out.shape == ref.shape
    np.testing.assert_allclose(np.asarray(out), np.asarray(ref), rtol=1e-3, atol=1e-3)
    print("KERNEL_OK")
</pallas_src>

<mosaic_0001>
module attributes {stable_mosaic.version = 11 : i64} {
  func.func @kernel(%arg0: i32, %arg1: memref<8x128xf32, #tpu.memory_space<vmem>>, %arg2: memref<128x128xbf16, #tpu.memory_space<vmem>>, %arg3: memref<128x128xbf16, #tpu.memory_space<vmem>>, %arg4: memref<1x128xf32, #tpu.memory_space<vmem>>, %arg5: memref<128x128xbf16, #tpu.memory_space<vmem>>, %arg6: memref<128x128xbf16, #tpu.memory_space<vmem>>, %arg7: memref<1x128xf32, #tpu.memory_space<vmem>>, %arg8: memref<128x128xbf16, #tpu.memory_space<vmem>>, %arg9: memref<128x128xbf16, #tpu.memory_space<vmem>>, %arg10: memref<1x128xf32, #tpu.memory_space<vmem>>, %arg11: memref<128x128xbf16, #tpu.memory_space<vmem>>, %arg12: memref<128x128xbf16, #tpu.memory_space<vmem>>, %arg13: memref<1x128xf32, #tpu.memory_space<vmem>>, %arg14: memref<128x256xbf16, #tpu.memory_space<vmem>>, %arg15: memref<128x256xbf16, #tpu.memory_space<vmem>>, %arg16: memref<1x256xf32, #tpu.memory_space<vmem>>, %arg17: memref<256x128xbf16, #tpu.memory_space<vmem>>, %arg18: memref<256x128xbf16, #tpu.memory_space<vmem>>, %arg19: memref<1x128xf32, #tpu.memory_space<vmem>>, %arg20: memref<8x128xf32, #tpu.memory_space<vmem>>) attributes {dimension_semantics = [#tpu.dimension_semantics<parallel>], iteration_bounds = array<i64: 1>, scalar_prefetch = 0 : i64, scratch_operands = 0 : i64, tpu.core_type = #tpu.core_type<tc>, window_params = [{transform_indices = @transform_0, window_bounds = array<i64: 8, 128>}, {pipeline_mode = #tpu.pipeline_mode<synchronous>, transform_indices = @transform_1, window_bounds = array<i64: 128, 128>}, {pipeline_mode = #tpu.pipeline_mode<synchronous>, transform_indices = @transform_2, window_bounds = array<i64: 128, 128>}, {pipeline_mode = #tpu.pipeline_mode<synchronous>, transform_indices = @transform_3, window_bounds = array<i64: 1, 128>}, {pipeline_mode = #tpu.pipeline_mode<synchronous>, transform_indices = @transform_4, window_bounds = array<i64: 128, 128>}, {pipeline_mode = #tpu.pipeline_mode<synchronous>, transform_indices = @transform_5, window_bounds = array<i64: 128, 128>}, {pipeline_mode = #tpu.pipeline_mode<synchronous>, transform_indices = @transform_6, window_bounds = array<i64: 1, 128>}, {pipeline_mode = #tpu.pipeline_mode<synchronous>, transform_indices = @transform_7, window_bounds = array<i64: 128, 128>}, {pipeline_mode = #tpu.pipeline_mode<synchronous>, transform_indices = @transform_8, window_bounds = array<i64: 128, 128>}, {pipeline_mode = #tpu.pipeline_mode<synchronous>, transform_indices = @transform_9, window_bounds = array<i64: 1, 128>}, {pipeline_mode = #tpu.pipeline_mode<synchronous>, transform_indices = @transform_10, window_bounds = array<i64: 128, 128>}, {pipeline_mode = #tpu.pipeline_mode<synchronous>, transform_indices = @transform_11, window_bounds = array<i64: 128, 128>}, {pipeline_mode = #tpu.pipeline_mode<synchronous>, transform_indices = @transform_12, window_bounds = array<i64: 1, 128>}, {pipeline_mode = #tpu.pipeline_mode<synchronous>, transform_indices = @transform_13, window_bounds = array<i64: 128, 256>}, {pipeline_mode = #tpu.pipeline_mode<synchronous>, transform_indices = @transform_14, window_bounds = array<i64: 128, 256>}, {pipeline_mode = #tpu.pipeline_mode<synchronous>, transform_indices = @transform_15, window_bounds = array<i64: 1, 256>}, {pipeline_mode = #tpu.pipeline_mode<synchronous>, transform_indices = @transform_16, window_bounds = array<i64: 256, 128>}, {pipeline_mode = #tpu.pipeline_mode<synchronous>, transform_indices = @transform_17, window_bounds = array<i64: 256, 128>}, {pipeline_mode = #tpu.pipeline_mode<synchronous>, transform_indices = @transform_18, window_bounds = array<i64: 1, 128>}, {transform_indices = @transform_19, window_bounds = array<i64: 8, 128>}]} {
    %c0 = arith.constant 0 : index
    %c0_0 = arith.constant 0 : index
    %0 = vector.load %arg1[%c0, %c0_0] : memref<8x128xf32, #tpu.memory_space<vmem>>, vector<8x128xf32>
    %c0_1 = arith.constant 0 : index
    %c0_2 = arith.constant 0 : index
    %1 = vector.load %arg2[%c0_1, %c0_2] : memref<128x128xbf16, #tpu.memory_space<vmem>>, vector<128x128xbf16>
    %c0_3 = arith.constant 0 : index
    %c0_4 = arith.constant 0 : index
    %2 = vector.load %arg3[%c0_3, %c0_4] : memref<128x128xbf16, #tpu.memory_space<vmem>>, vector<128x128xbf16>
    %c0_5 = arith.constant 0 : index
    %c0_6 = arith.constant 0 : index
    %3 = vector.load %arg4[%c0_5, %c0_6] : memref<1x128xf32, #tpu.memory_space<vmem>>, vector<1x128xf32>
    %4 = arith.truncf %0 : vector<8x128xf32> to vector<8x128xbf16>
    %5 = arith.extf %4 : vector<8x128xbf16> to vector<8x128xf32>
    %6 = arith.subf %0, %5 : vector<8x128xf32>
    %7 = arith.truncf %6 : vector<8x128xf32> to vector<8x128xbf16>
    %cst = arith.constant dense<0.000000e+00> : vector<8x128xf32>
    %8 = tpu.matmul %4, %1, %cst {dimension_numbers = #tpu.dot_dimension_numbers<[1], [0], [0], [1], [0, 0, 1, 1], [], []>} : vector<8x128xbf16>, vector<128x128xbf16>, vector<8x128xf32> -> vector<8x128xf32>
    %cst_7 = arith.constant dense<0.000000e+00> : vector<8x128xf32>
    %9 = tpu.matmul %7, %1, %cst_7 {dimension_numbers = #tpu.dot_dimension_numbers<[1], [0], [0], [1], [0, 0, 1, 1], [], []>} : vector<8x128xbf16>, vector<128x128xbf16>, vector<8x128xf32> -> vector<8x128xf32>
    %10 = arith.addf %8, %9 : vector<8x128xf32>
    %cst_8 = arith.constant dense<0.000000e+00> : vector<8x128xf32>
    %11 = tpu.matmul %4, %2, %cst_8 {dimension_numbers = #tpu.dot_dimension_numbers<[1], [0], [0], [1], [0, 0, 1, 1], [], []>} : vector<8x128xbf16>, vector<128x128xbf16>, vector<8x128xf32> -> vector<8x128xf32>
    %12 = arith.addf %10, %11 : vector<8x128xf32>
    %13 = vector.broadcast %3 : vector<1x128xf32> to vector<8x128xf32>
    %14 = arith.addf %12, %13 : vector<8x128xf32>
    %cst_9 = arith.constant 0.000000e+00 : f32
    %15 = vector.broadcast %cst_9 : f32 to vector<8x128xf32>
    %16 = arith.maximumf %14, %15 : vector<8x128xf32>
    %c0_10 = arith.constant 0 : index
    %c0_11 = arith.constant 0 : index
    %17 = vector.load %arg5[%c0_10, %c0_11] : memref<128x128xbf16, #tpu.memory_space<vmem>>, vector<128x128xbf16>
    %c0_12 = arith.constant 0 : index
    %c0_13 = arith.constant 0 : index
    %18 = vector.load %arg6[%c0_12, %c0_13] : memref<128x128xbf16, #tpu.memory_space<vmem>>, vector<128x128xbf16>
    %c0_14 = arith.constant 0 : index
    %c0_15 = arith.constant 0 : index
    %19 = vector.load %arg7[%c0_14, %c0_15] : memref<1x128xf32, #tpu.memory_space<vmem>>, vector<1x128xf32>
    %20 = arith.truncf %16 : vector<8x128xf32> to vector<8x128xbf16>
    %21 = arith.extf %20 : vector<8x128xbf16> to vector<8x128xf32>
    %22 = arith.subf %16, %21 : vector<8x128xf32>
    %23 = arith.truncf %22 : vector<8x128xf32> to vector<8x128xbf16>
    %cst_16 = arith.constant dense<0.000000e+00> : vector<8x128xf32>
    %24 = tpu.matmul %20, %17, %cst_16 {dimension_numbers = #tpu.dot_dimension_numbers<[1], [0], [0], [1], [0, 0, 1, 1], [], []>} : vector<8x128xbf16>, vector<128x128xbf16>, vector<8x128xf32> -> vector<8x128xf32>
    %cst_17 = arith.constant dense<0.000000e+00> : vector<8x128xf32>
    %25 = tpu.matmul %23, %17, %cst_17 {dimension_numbers = #tpu.dot_dimension_numbers<[1], [0], [0], [1], [0, 0, 1, 1], [], []>} : vector<8x128xbf16>, vector<128x128xbf16>, vector<8x128xf32> -> vector<8x128xf32>
    %26 = arith.addf %24, %25 : vector<8x128xf32>
    %cst_18 = arith.constant dense<0.000000e+00> : vector<8x128xf32>
    %27 = tpu.matmul %20, %18, %cst_18 {dimension_numbers = #tpu.dot_dimension_numbers<[1], [0], [0], [1], [0, 0, 1, 1], [], []>} : vector<8x128xbf16>, vector<128x128xbf16>, vector<8x128xf32> -> vector<8x128xf32>
    %28 = arith.addf %26, %27 : vector<8x128xf32>
    %29 = vector.broadcast %19 : vector<1x128xf32> to vector<8x128xf32>
    %30 = arith.addf %28, %29 : vector<8x128xf32>
    %cst_19 = arith.constant 0.000000e+00 : f32
    %31 = vector.broadcast %cst_19 : f32 to vector<8x128xf32>
    %32 = arith.maximumf %30, %31 : vector<8x128xf32>
    %c0_20 = arith.constant 0 : index
    %c0_21 = arith.constant 0 : index
    %33 = vector.load %arg8[%c0_20, %c0_21] : memref<128x128xbf16, #tpu.memory_space<vmem>>, vector<128x128xbf16>
    %c0_22 = arith.constant 0 : index
    %c0_23 = arith.constant 0 : index
    %34 = vector.load %arg9[%c0_22, %c0_23] : memref<128x128xbf16, #tpu.memory_space<vmem>>, vector<128x128xbf16>
    %c0_24 = arith.constant 0 : index
    %c0_25 = arith.constant 0 : index
    %35 = vector.load %arg10[%c0_24, %c0_25] : memref<1x128xf32, #tpu.memory_space<vmem>>, vector<1x128xf32>
    %36 = arith.truncf %32 : vector<8x128xf32> to vector<8x128xbf16>
    %37 = arith.extf %36 : vector<8x128xbf16> to vector<8x128xf32>
    %38 = arith.subf %32, %37 : vector<8x128xf32>
    %39 = arith.truncf %38 : vector<8x128xf32> to vector<8x128xbf16>
    %cst_26 = arith.constant dense<0.000000e+00> : vector<8x128xf32>
    %40 = tpu.matmul %36, %33, %cst_26 {dimension_numbers = #tpu.dot_dimension_numbers<[1], [0], [0], [1], [0, 0, 1, 1], [], []>} : vector<8x128xbf16>, vector<128x128xbf16>, vector<8x128xf32> -> vector<8x128xf32>
    %cst_27 = arith.constant dense<0.000000e+00> : vector<8x128xf32>
    %41 = tpu.matmul %39, %33, %cst_27 {dimension_numbers = #tpu.dot_dimension_numbers<[1], [0], [0], [1], [0, 0, 1, 1], [], []>} : vector<8x128xbf16>, vector<128x128xbf16>, vector<8x128xf32> -> vector<8x128xf32>
    %42 = arith.addf %40, %41 : vector<8x128xf32>
    %cst_28 = arith.constant dense<0.000000e+00> : vector<8x128xf32>
    %43 = tpu.matmul %36, %34, %cst_28 {dimension_numbers = #tpu.dot_dimension_numbers<[1], [0], [0], [1], [0, 0, 1, 1], [], []>} : vector<8x128xbf16>, vector<128x128xbf16>, vector<8x128xf32> -> vector<8x128xf32>
    %44 = arith.addf %42, %43 : vector<8x128xf32>
    %45 = vector.broadcast %35 : vector<1x128xf32> to vector<8x128xf32>
    %46 = arith.addf %44, %45 : vector<8x128xf32>
    %cst_29 = arith.constant 0.000000e+00 : f32
    %47 = vector.broadcast %cst_29 : f32 to vector<8x128xf32>
    %48 = arith.maximumf %46, %47 : vector<8x128xf32>
    %c0_30 = arith.constant 0 : index
    %c0_31 = arith.constant 0 : index
    %49 = vector.load %arg11[%c0_30, %c0_31] : memref<128x128xbf16, #tpu.memory_space<vmem>>, vector<128x128xbf16>
    %c0_32 = arith.constant 0 : index
    %c0_33 = arith.constant 0 : index
    %50 = vector.load %arg12[%c0_32, %c0_33] : memref<128x128xbf16, #tpu.memory_space<vmem>>, vector<128x128xbf16>
    %c0_34 = arith.constant 0 : index
    %c0_35 = arith.constant 0 : index
    %51 = vector.load %arg13[%c0_34, %c0_35] : memref<1x128xf32, #tpu.memory_space<vmem>>, vector<1x128xf32>
    %52 = arith.truncf %48 : vector<8x128xf32> to vector<8x128xbf16>
    %53 = arith.extf %52 : vector<8x128xbf16> to vector<8x128xf32>
    %54 = arith.subf %48, %53 : vector<8x128xf32>
    %55 = arith.truncf %54 : vector<8x128xf32> to vector<8x128xbf16>
    %cst_36 = arith.constant dense<0.000000e+00> : vector<8x128xf32>
    %56 = tpu.matmul %52, %49, %cst_36 {dimension_numbers = #tpu.dot_dimension_numbers<[1], [0], [0], [1], [0, 0, 1, 1], [], []>} : vector<8x128xbf16>, vector<128x128xbf16>, vector<8x128xf32> -> vector<8x128xf32>
    %cst_37 = arith.constant dense<0.000000e+00> : vector<8x128xf32>
    %57 = tpu.matmul %55, %49, %cst_37 {dimension_numbers = #tpu.dot_dimension_numbers<[1], [0], [0], [1], [0, 0, 1, 1], [], []>} : vector<8x128xbf16>, vector<128x128xbf16>, vector<8x128xf32> -> vector<8x128xf32>
    %58 = arith.addf %56, %57 : vector<8x128xf32>
    %cst_38 = arith.constant dense<0.000000e+00> : vector<8x128xf32>
    %59 = tpu.matmul %52, %50, %cst_38 {dimension_numbers = #tpu.dot_dimension_numbers<[1], [0], [0], [1], [0, 0, 1, 1], [], []>} : vector<8x128xbf16>, vector<128x128xbf16>, vector<8x128xf32> -> vector<8x128xf32>
    %60 = arith.addf %58, %59 : vector<8x128xf32>
    %61 = vector.broadcast %51 : vector<1x128xf32> to vector<8x128xf32>
    %62 = arith.addf %60, %61 : vector<8x128xf32>
    %cst_39 = arith.constant 0.000000e+00 : f32
    %63 = vector.broadcast %cst_39 : f32 to vector<8x128xf32>
    %64 = arith.maximumf %62, %63 : vector<8x128xf32>
    %c0_40 = arith.constant 0 : index
    %c0_41 = arith.constant 0 : index
    %65 = vector.load %arg14[%c0_40, %c0_41] : memref<128x256xbf16, #tpu.memory_space<vmem>>, vector<128x256xbf16>
    %c0_42 = arith.constant 0 : index
    %c0_43 = arith.constant 0 : index
    %66 = vector.load %arg15[%c0_42, %c0_43] : memref<128x256xbf16, #tpu.memory_space<vmem>>, vector<128x256xbf16>
    %c0_44 = arith.constant 0 : index
    %c0_45 = arith.constant 0 : index
    %67 = vector.load %arg16[%c0_44, %c0_45] : memref<1x256xf32, #tpu.memory_space<vmem>>, vector<1x256xf32>
    %68 = arith.truncf %64 : vector<8x128xf32> to vector<8x128xbf16>
    %69 = arith.extf %68 : vector<8x128xbf16> to vector<8x128xf32>
    %70 = arith.subf %64, %69 : vector<8x128xf32>
    %71 = arith.truncf %70 : vector<8x128xf32> to vector<8x128xbf16>
    %cst_46 = arith.constant dense<0.000000e+00> : vector<8x256xf32>
    %72 = tpu.matmul %68, %65, %cst_46 {dimension_numbers = #tpu.dot_dimension_numbers<[1], [0], [0], [1], [0, 0, 1, 1], [], []>} : vector<8x128xbf16>, vector<128x256xbf16>, vector<8x256xf32> -> vector<8x256xf32>
    %cst_47 = arith.constant dense<0.000000e+00> : vector<8x256xf32>
    %73 = tpu.matmul %71, %65, %cst_47 {dimension_numbers = #tpu.dot_dimension_numbers<[1], [0], [0], [1], [0, 0, 1, 1], [], []>} : vector<8x128xbf16>, vector<128x256xbf16>, vector<8x256xf32> -> vector<8x256xf32>
    %74 = arith.addf %72, %73 : vector<8x256xf32>
    %cst_48 = arith.constant dense<0.000000e+00> : vector<8x256xf32>
    %75 = tpu.matmul %68, %66, %cst_48 {dimension_numbers = #tpu.dot_dimension_numbers<[1], [0], [0], [1], [0, 0, 1, 1], [], []>} : vector<8x128xbf16>, vector<128x256xbf16>, vector<8x256xf32> -> vector<8x256xf32>
    %76 = arith.addf %74, %75 : vector<8x256xf32>
    %77 = vector.broadcast %67 : vector<1x256xf32> to vector<8x256xf32>
    %78 = arith.addf %76, %77 : vector<8x256xf32>
    %cst_49 = arith.constant 0.000000e+00 : f32
    %79 = vector.broadcast %cst_49 : f32 to vector<8x256xf32>
    %80 = arith.maximumf %78, %79 : vector<8x256xf32>
    %c0_50 = arith.constant 0 : index
    %c0_51 = arith.constant 0 : index
    %81 = vector.load %arg17[%c0_50, %c0_51] : memref<256x128xbf16, #tpu.memory_space<vmem>>, vector<256x128xbf16>
    %c0_52 = arith.constant 0 : index
    %c0_53 = arith.constant 0 : index
    %82 = vector.load %arg18[%c0_52, %c0_53] : memref<256x128xbf16, #tpu.memory_space<vmem>>, vector<256x128xbf16>
    %c0_54 = arith.constant 0 : index
    %c0_55 = arith.constant 0 : index
    %83 = vector.load %arg19[%c0_54, %c0_55] : memref<1x128xf32, #tpu.memory_space<vmem>>, vector<1x128xf32>
    %84 = arith.truncf %80 : vector<8x256xf32> to vector<8x256xbf16>
    %85 = arith.extf %84 : vector<8x256xbf16> to vector<8x256xf32>
    %86 = arith.subf %80, %85 : vector<8x256xf32>
    %87 = arith.truncf %86 : vector<8x256xf32> to vector<8x256xbf16>
    %cst_56 = arith.constant dense<0.000000e+00> : vector<8x128xf32>
    %88 = tpu.matmul %84, %81, %cst_56 {dimension_numbers = #tpu.dot_dimension_numbers<[1], [0], [0], [1], [0, 0, 1, 1], [], []>} : vector<8x256xbf16>, vector<256x128xbf16>, vector<8x128xf32> -> vector<8x128xf32>
    %cst_57 = arith.constant dense<0.000000e+00> : vector<8x128xf32>
    %89 = tpu.matmul %87, %81, %cst_57 {dimension_numbers = #tpu.dot_dimension_numbers<[1], [0], [0], [1], [0, 0, 1, 1], [], []>} : vector<8x256xbf16>, vector<256x128xbf16>, vector<8x128xf32> -> vector<8x128xf32>
    %90 = arith.addf %88, %89 : vector<8x128xf32>
    %cst_58 = arith.constant dense<0.000000e+00> : vector<8x128xf32>
    %91 = tpu.matmul %84, %82, %cst_58 {dimension_numbers = #tpu.dot_dimension_numbers<[1], [0], [0], [1], [0, 0, 1, 1], [], []>} : vector<8x256xbf16>, vector<256x128xbf16>, vector<8x128xf32> -> vector<8x128xf32>
    %92 = arith.addf %90, %91 : vector<8x128xf32>
    %93 = vector.broadcast %83 : vector<1x128xf32> to vector<8x128xf32>
    %94 = arith.addf %92, %93 : vector<8x128xf32>
    %95 = math.tanh %94 : vector<8x128xf32>
    %c0_59 = arith.constant 0 : index
    %c0_60 = arith.constant 0 : index
    %96 = vector.load %arg20[%c0_59, %c0_60] : memref<8x128xf32, #tpu.memory_space<vmem>>, vector<8x128xf32>
    tpu.vector_store %arg20[%c0_59, %c0_60], %95 {strides = array<i32>} : memref<8x128xf32, #tpu.memory_space<vmem>>, vector<8x128xf32>,
    return
  }
  func.func @transform_0(%arg0: i32) -> (i32, i32) {
    %c0_i32 = arith.constant 0 : i32
    %c0_i32_0 = arith.constant 0 : i32
    return %arg0, %c0_i32 : i32, i32
  }
  func.func @transform_1(%arg0: i32) -> (i32, i32) {
    %c0_i32 = arith.constant 0 : i32
    %c0_i32_0 = arith.constant 0 : i32
    %c0_i32_1 = arith.constant 0 : i32
    return %c0_i32, %c0_i32_0 : i32, i32
  }
  func.func @transform_2(%arg0: i32) -> (i32, i32) {
    %c0_i32 = arith.constant 0 : i32
    %c0_i32_0 = arith.constant 0 : i32
    %c0_i32_1 = arith.constant 0 : i32
    return %c0_i32, %c0_i32_0 : i32, i32
  }
  func.func @transform_3(%arg0: i32) -> (i32, i32) {
    %c0_i32 = arith.constant 0 : i32
    %c0_i32_0 = arith.constant 0 : i32
    %c0_i32_1 = arith.constant 0 : i32
    return %c0_i32, %c0_i32_0 : i32, i32
  }
  func.func @transform_4(%arg0: i32) -> (i32, i32) {
    %c0_i32 = arith.constant 0 : i32
    %c0_i32_0 = arith.constant 0 : i32
    %c0_i32_1 = arith.constant 0 : i32
    return %c0_i32, %c0_i32_0 : i32, i32
  }
  func.func @transform_5(%arg0: i32) -> (i32, i32) {
    %c0_i32 = arith.constant 0 : i32
    %c0_i32_0 = arith.constant 0 : i32
    %c0_i32_1 = arith.constant 0 : i32
    return %c0_i32, %c0_i32_0 : i32, i32
  }
  func.func @transform_6(%arg0: i32) -> (i32, i32) {
    %c0_i32 = arith.constant 0 : i32
    %c0_i32_0 = arith.constant 0 : i32
    %c0_i32_1 = arith.constant 0 : i32
    return %c0_i32, %c0_i32_0 : i32, i32
  }
  func.func @transform_7(%arg0: i32) -> (i32, i32) {
    %c0_i32 = arith.constant 0 : i32
    %c0_i32_0 = arith.constant 0 : i32
    %c0_i32_1 = arith.constant 0 : i32
    return %c0_i32, %c0_i32_0 : i32, i32
  }
  func.func @transform_8(%arg0: i32) -> (i32, i32) {
    %c0_i32 = arith.constant 0 : i32
    %c0_i32_0 = arith.constant 0 : i32
    %c0_i32_1 = arith.constant 0 : i32
    return %c0_i32, %c0_i32_0 : i32, i32
  }
  func.func @transform_9(%arg0: i32) -> (i32, i32) {
    %c0_i32 = arith.constant 0 : i32
    %c0_i32_0 = arith.constant 0 : i32
    %c0_i32_1 = arith.constant 0 : i32
    return %c0_i32, %c0_i32_0 : i32, i32
  }
  func.func @transform_10(%arg0: i32) -> (i32, i32) {
    %c0_i32 = arith.constant 0 : i32
    %c0_i32_0 = arith.constant 0 : i32
    %c0_i32_1 = arith.constant 0 : i32
    return %c0_i32, %c0_i32_0 : i32, i32
  }
  func.func @transform_11(%arg0: i32) -> (i32, i32) {
    %c0_i32 = arith.constant 0 : i32
    %c0_i32_0 = arith.constant 0 : i32
    %c0_i32_1 = arith.constant 0 : i32
    return %c0_i32, %c0_i32_0 : i32, i32
  }
  func.func @transform_12(%arg0: i32) -> (i32, i32) {
    %c0_i32 = arith.constant 0 : i32
    %c0_i32_0 = arith.constant 0 : i32
    %c0_i32_1 = arith.constant 0 : i32
    return %c0_i32, %c0_i32_0 : i32, i32
  }
  func.func @transform_13(%arg0: i32) -> (i32, i32) {
    %c0_i32 = arith.constant 0 : i32
    %c0_i32_0 = arith.constant 0 : i32
    %c0_i32_1 = arith.constant 0 : i32
    return %c0_i32, %c0_i32_0 : i32, i32
  }
  func.func @transform_14(%arg0: i32) -> (i32, i32) {
    %c0_i32 = arith.constant 0 : i32
    %c0_i32_0 = arith.constant 0 : i32
    %c0_i32_1 = arith.constant 0 : i32
    return %c0_i32, %c0_i32_0 : i32, i32
  }
  func.func @transform_15(%arg0: i32) -> (i32, i32) {
    %c0_i32 = arith.constant 0 : i32
    %c0_i32_0 = arith.constant 0 : i32
    %c0_i32_1 = arith.constant 0 : i32
    return %c0_i32, %c0_i32_0 : i32, i32
  }
  func.func @transform_16(%arg0: i32) -> (i32, i32) {
    %c0_i32 = arith.constant 0 : i32
    %c0_i32_0 = arith.constant 0 : i32
    %c0_i32_1 = arith.constant 0 : i32
    return %c0_i32, %c0_i32_0 : i32, i32
  }
  func.func @transform_17(%arg0: i32) -> (i32, i32) {
    %c0_i32 = arith.constant 0 : i32
    %c0_i32_0 = arith.constant 0 : i32
    %c0_i32_1 = arith.constant 0 : i32
    return %c0_i32, %c0_i32_0 : i32, i32
  }
  func.func @transform_18(%arg0: i32) -> (i32, i32) {
    %c0_i32 = arith.constant 0 : i32
    %c0_i32_0 = arith.constant 0 : i32
    %c0_i32_1 = arith.constant 0 : i32
    return %c0_i32, %c0_i32_0 : i32, i32
  }
  func.func @transform_19(%arg0: i32) -> (i32, i32) {
    %c0_i32 = arith.constant 0 : i32
    %c0_i32_0 = arith.constant 0 : i32
    return %arg0, %c0_i32 : i32, i32
  }
}

</mosaic_0001>

<llo_original>
// kernel: tpu_custom_call.1
$region0: #{tpu_custom_call.1}
  #allocation0 [shape = 'u32[]', space=smem, size = 0x4, offset = 0x4, fixed_abs, tag = 'smem constant byte address 0x4 - core index']
  #allocation1 [shape = 'u32[72,128]{1,0:T(1,128)}', space=vmem, size = 0x9000, scoped, tag = 'internal scratch']
  %s0 = inlined_call_operand.hbm [shape: f32[8,128], index: 0, kind: input, shape index: {}]
  %s1 = inlined_call_operand.hbm [shape: bf16[128,128], index: 1, kind: input, shape index: {}]
  %s2 = inlined_call_operand.hbm [shape: bf16[128,128], index: 2, kind: input, shape index: {}]
  %s3 = inlined_call_operand.vmem [shape: f32[1,128], index: 3, kind: input, shape index: {}]
  %s4 = inlined_call_operand.hbm [shape: bf16[128,128], index: 4, kind: input, shape index: {}]
  %s5 = inlined_call_operand.hbm [shape: bf16[128,128], index: 5, kind: input, shape index: {}]
  %s6 = inlined_call_operand.vmem [shape: f32[1,128], index: 6, kind: input, shape index: {}]
  %s7 = inlined_call_operand.hbm [shape: bf16[128,128], index: 7, kind: input, shape index: {}]
  %s8 = inlined_call_operand.hbm [shape: bf16[128,128], index: 8, kind: input, shape index: {}]
  %s9 = inlined_call_operand.vmem [shape: f32[1,128], index: 9, kind: input, shape index: {}]
  %s10 = inlined_call_operand.hbm [shape: bf16[128,128], index: 10, kind: input, shape index: {}]
  %s11 = inlined_call_operand.hbm [shape: bf16[128,128], index: 11, kind: input, shape index: {}]
  %s12 = inlined_call_operand.vmem [shape: f32[1,128], index: 12, kind: input, shape index: {}]
  %s13 = inlined_call_operand.hbm [shape: bf16[128,256], index: 13, kind: input, shape index: {}]
  %s14 = inlined_call_operand.hbm [shape: bf16[128,256], index: 14, kind: input, shape index: {}]
  %s15 = inlined_call_operand.vmem [shape: f32[1,256], index: 15, kind: input, shape index: {}]
  %s16 = inlined_call_operand.hbm [shape: bf16[256,128], index: 16, kind: input, shape index: {}]
  %s17 = inlined_call_operand.hbm [shape: bf16[256,128], index: 17, kind: input, shape index: {}]
  %s18 = inlined_call_operand.vmem [shape: f32[1,128], index: 18, kind: input, shape index: {}]
  %s19 = inlined_call_operand.hbm [shape: f32[8,128], index: 19, kind: output, shape index: {}]
  %s20 = sld [smem:[#allocation0]]
  $region138: #{tpu_custom_call.1} parent=0
    _
  %s22 = ssub.s32 1, %s20
  %s23 = scalar_select 0, %s22, %s20
  $region1: #{tpu_custom_call.1} parent=0
    #allocation2 [shape = 'u8[4096]{0}', space=vmem, size = 0x1000, scoped, tag = 'input window, operand 0, single buffered']
    #allocation3 [shape = 's32[1]{0}', space=sflag, size = 0x4, scoped, tag = 'scoped memory for tpu_custom_call.1']
    #allocation4 [shape = 's32[1]{0}', space=sflag, size = 0x4, scoped, tag = 'scoped memory for tpu_custom_call.1']
    #allocation5 [shape = 'u8[32768]{0}', space=vmem, size = 0x8000, scoped, tag = 'input window, operand 1, single buffered']
    #allocation6 [shape = 's32[1]{0}', space=sflag, size = 0x4, scoped, tag = 'scoped memory for tpu_custom_call.1']
    #allocation7 [shape = 'u8[32768]{0}', space=vmem, size = 0x8000, scoped, tag = 'input window, operand 2, single buffered']
    #allocation8 [shape = 'u8[32768]{0}', space=vmem, size = 0x8000, scoped, tag = 'input window, operand 4, single buffered']
    #allocation9 [shape = 's32[1]{0}', space=sflag, size = 0x4, scoped, tag = 'scoped memory for tpu_custom_call.1']
    #allocation10 [shape = 'u8[32768]{0}', space=vmem, size = 0x8000, scoped, tag = 'input window, operand 5, single buffered']
    #allocation11 [shape = 'u8[32768]{0}', space=vmem, size = 0x8000, scoped, tag = 'input window, operand 7, single buffered']
    #allocation12 [shape = 's32[1]{0}', space=sflag, size = 0x4, scoped, tag = 'scoped memory for tpu_custom_call.1']
    #allocation13 [shape = 'u8[32768]{0}', space=vmem, size = 0x8000, scoped, tag = 'input window, operand 8, single buffered']
    #allocation14 [shape = 'u8[32768]{0}', space=vmem, size = 0x8000, scoped, tag = 'input window, operand 10, single buffered']
    #allocation15 [shape = 's32[1]{0}', space=sflag, size = 0x4, scoped, tag = 'scoped memory for tpu_custom_call.1']
    #allocation16 [shape = 'u8[32768]{0}', space=vmem, size = 0x8000, scoped, tag = 'input window, operand 11, single buffered']
    #allocation17 [shape = 'u8[65536]{0}', space=vmem, size = 0x10000, scoped, tag = 'input window, operand 13, single buffered']
    #allocation18 [shape = 's32[1]{0}', space=sflag, size = 0x4, scoped, tag = 'scoped memory for tpu_custom_call.1']
    #allocation19 [shape = 'u8[65536]{0}', space=vmem, size = 0x10000, scoped, tag = 'input window, operand 14, single buffered']
    #allocation20 [shape = 'u8[65536]{0}', space=vmem, size = 0x10000, scoped, tag = 'input window, operand 16, single buffered']
    #allocation21 [shape = 's32[1]{0}', space=sflag, size = 0x4, scoped, tag = 'scoped memory for tpu_custom_call.1']
    #allocation22 [shape = 'u8[65536]{0}', space=vmem, size = 0x10000, scoped, tag = 'input window, operand 17, single buffered']
    #allocation23 [shape = 'u8[4096]{0}', space=vmem, size = 0x1000, scoped, tag = 'output window, operand 0, single buffered']
    %24 = vsyncpa [#allocation3], 0
    %25 = vsyncpa [#allocation6], 0
    %26 = vsyncpa [#allocation9], 0
    %27 = vsyncpa [#allocation12], 0
    %28 = vsyncpa [#allocation15], 0
    %29 = vsyncpa [#allocation18], 0
    %30 = vsyncpa [#allocation21], 0
    %31 = vsyncpa [#allocation4], 0
    // Predicated region
    $region2: #{tpu_custom_call.1} parent=1 // pred_check
      _
    $region3: #{tpu_custom_call.1} parent=1 // pred_check_branch
      %33 = sbr.rel (0) target = $region5
    $region4: #{tpu_custom_call.1} parent=1 // pred_region
      %35 = vsyncadd [#allocation3], 0
      %s37 = sshll.u32 %s0, 4
      %s38 = int_to_ptr.hbm [resolvable:$true] %s37
      %s39 = sshll.u32 [#allocation2], 4
      %s40 = int_to_ptr.vmem [resolvable:$true] %s39
      %42 = dma.hbm_to_vmem [thread:$0]  %s38, 128, %s40, [#allocation3]
    $region5: #{tpu_custom_call.1} parent=1 // pred_fallthru
      _
    // Predicated region
    $region6: #{tpu_custom_call.1} parent=1 // pred_check
      _
    $region7: #{tpu_custom_call.1} parent=1 // pred_check_branch
      %44 = sbr.rel (0) target = $region9
    $region8: #{tpu_custom_call.1} parent=1 // pred_region
      %46 = vsyncadd [#allocation6], 0
      %s47 = sshll.u32 %s1, 4
      %s48 = int_to_ptr.hbm [resolvable:$true] %s47
      %s49 = sshll.u32 [#allocation5], 4
      %s50 = int_to_ptr.vmem [resolvable:$true] %s49
      %55 = dma.hbm_to_vmem [thread:$0]  %s48, 1024, %s50, [#allocation6], 64, 64, 4
    $region9: #{tpu_custom_call.1} parent=1 // pred_fallthru
      _
    // Predicated region
    $region10: #{tpu_custom_call.1} parent=1 // pred_check
      _
    $region11: #{tpu_custom_call.1} parent=1 // pred_check_branch
      %57 = sbr.rel (0) target = $region13
    $region12: #{tpu_custom_call.1} parent=1 // pred_region
      %59 = vsyncadd [#allocation6], 0
      %s60 = sshll.u32 %s2, 4
      %s61 = int_to_ptr.hbm [resolvable:$true] %s60
      %s62 = sshll.u32 [#allocation7], 4
      %s63 = int_to_ptr.vmem [resolvable:$true] %s62
      %68 = dma.hbm_to_vmem [thread:$0]  %s61, 1024, %s63, [#allocation6], 64, 64, 4
    $region13: #{tpu_custom_call.1} parent=1 // pred_fallthru
      _
    // Predicated region
    $region14: #{tpu_custom_call.1} parent=1 // pred_check
      _
    $region15: #{tpu_custom_call.1} parent=1 // pred_check_branch
      %70 = sbr.rel (0) target = $region17
    $region16: #{tpu_custom_call.1} parent=1 // pred_region
      _
    $region17: #{tpu_custom_call.1} parent=1 // pred_fallthru
      _
    // Predicated region
    $region18: #{tpu_custom_call.1} parent=1 // pred_check
      _
    $region19: #{tpu_custom_call.1} parent=1 // pred_check_branch
      %72 = sbr.rel (0) target = $region21
    $region20: #{tpu_custom_call.1} parent=1 // pred_region
      %74 = vsyncadd [#allocation9], 0
      %s75 = sshll.u32 %s4, 4
      %s76 = int_to_ptr.hbm [resolvable:$true] %s75
      %s77 = sshll.u32 [#allocation8], 4
      %s78 = int_to_ptr.vmem [resolvable:$true] %s77
      %83 = dma.hbm_to_vmem [thread:$0]  %s76, 1024, %s78, [#allocation9], 64, 64, 4
    $region21: #{tpu_custom_call.1} parent=1 // pred_fallthru
      _
    // Predicated region
    $region22: #{tpu_custom_call.1} parent=1 // pred_check
      _
    $region23: #{tpu_custom_call.1} parent=1 // pred_check_branch
      %85 = sbr.rel (0) target = $region25
    $region24: #{tpu_custom_call.1} parent=1 // pred_region
      %87 = vsyncadd [#allocation9], 0
      %s88 = sshll.u32 %s5, 4
      %s89 = int_to_ptr.hbm [resolvable:$true] %s88
      %s90 = sshll.u32 [#allocation10], 4
      %s91 = int_to_ptr.vmem [resolvable:$true] %s90
      %96 = dma.hbm_to_vmem [thread:$0]  %s89, 1024, %s91, [#allocation9], 64, 64, 4
    $region25: #{tpu_custom_call.1} parent=1 // pred_fallthru
      _
    // Predicated region
    $region26: #{tpu_custom_call.1} parent=1 // pred_check
      _
    $region27: #{tpu_custom_call.1} parent=1 // pred_check_branch
      %98 = sbr.rel (0) target = $region29
    $region28: #{tpu_custom_call.1} parent=1 // pred_region
      _
    $region29: #{tpu_custom_call.1} parent=1 // pred_fallthru
      _
    // Predicated region
    $region30: #{tpu_custom_call.1} parent=1 // pred_check
      _
    $region31: #{tpu_custom_call.1} parent=1 // pred_check_branch
      %100 = sbr.rel (0) target = $region33
    $region32: #{tpu_custom_call.1} parent=1 // pred_region
      %102 = vsyncadd [#allocation12], 0
      %s103 = sshll.u32 %s7, 4
      %s104 = int_to_ptr.hbm [resolvable:$true] %s103
      %s105 = sshll.u32 [#allocation11], 4
      %s106 = int_to_ptr.vmem [resolvable:$true] %s105
      %111 = dma.hbm_to_vmem [thread:$0]  %s104, 1024, %s106, [#allocation12], 64, 64, 4
    $region33: #{tpu_custom_call.1} parent=1 // pred_fallthru
      _
    // Predicated region
    $region34: #{tpu_custom_call.1} parent=1 // pred_check
      _
    $region35: #{tpu_custom_call.1} parent=1 // pred_check_branch
      %113 = sbr.rel (0) target = $region37
    $region36: #{tpu_custom_call.1} parent=1 // pred_region
      %115 = vsyncadd [#allocation12], 0
      %s116 = sshll.u32 %s8, 4
      %s117 = int_to_ptr.hbm [resolvable:$true] %s116
      %s118 = sshll.u32 [#allocation13], 4
      %s119 = int_to_ptr.vmem [resolvable:$true] %s118
      %124 = dma.hbm_to_vmem [thread:$0]  %s117, 1024, %s119, [#allocation12], 64, 64, 4
    $region37: #{tpu_custom_call.1} parent=1 // pred_fallthru
      _
    // Predicated region
    $region38: #{tpu_custom_call.1} parent=1 // pred_check
      _
    $region39: #{tpu_custom_call.1} parent=1 // pred_check_branch
      %126 = sbr.rel (0) target = $region41
    $region40: #{tpu_custom_call.1} parent=1 // pred_region
      _
    $region41: #{tpu_custom_call.1} parent=1 // pred_fallthru
      _
    // Predicated region
    $region42: #{tpu_custom_call.1} parent=1 // pred_check
      _
    $region43: #{tpu_custom_call.1} parent=1 // pred_check_branch
      %128 = sbr.rel (0) target = $region45
    $region44: #{tpu_custom_call.1} parent=1 // pred_region
      %130 = vsyncadd [#allocation15], 0
      %s131 = sshll.u32 %s10, 4
      %s132 = int_to_ptr.hbm [resolvable:$true] %s131
      %s133 = sshll.u32 [#allocation14], 4
      %s134 = int_to_ptr.vmem [resolvable:$true] %s133
      %139 = dma.hbm_to_vmem [thread:$0]  %s132, 1024, %s134, [#allocation15], 64, 64, 4
    $region45: #{tpu_custom_call.1} parent=1 // pred_fallthru
      _
    // Predicated region
    $region46: #{tpu_custom_call.1} parent=1 // pred_check
      _
    $region47: #{tpu_custom_call.1} parent=1 // pred_check_branch
      %141 = sbr.rel (0) target = $region49
    $region48: #{tpu_custom_call.1} parent=1 // pred_region
      %143 = vsyncadd [#allocation15], 0
      %s144 = sshll.u32 %s11, 4
      %s145 = int_to_ptr.hbm [resolvable:$true] %s144
      %s146 = sshll.u32 [#allocation16], 4
      %s147 = int_to_ptr.vmem [resolvable:$true] %s146
      %152 = dma.hbm_to_vmem [thread:$0]  %s145, 1024, %s147, [#allocation15], 64, 64, 4
    $region49: #{tpu_custom_call.1} parent=1 // pred_fallthru
      _
    // Predicated region
    $region50: #{tpu_custom_call.1} parent=1 // pred_check
      _
    $region51: #{tpu_custom_call.1} parent=1 // pred_check_branch
      %154 = sbr.rel (0) target = $region53
    $region52: #{tpu_custom_call.1} parent=1 // pred_region
      _
    $region53: #{tpu_custom_call.1} parent=1 // pred_fallthru
      _
    // Predicated region
    $region54: #{tpu_custom_call.1} parent=1 // pred_check
      _
    $region55: #{tpu_custom_call.1} parent=1 // pred_check_branch
      %156 = sbr.rel (0) target = $region57
    $region56: #{tpu_custom_call.1} parent=1 // pred_region
      %158 = vsyncadd [#allocation18], 0
      %s159 = sshll.u32 %s13, 4
      %s160 = int_to_ptr.hbm [resolvable:$true] %s159
      %s161 = sshll.u32 [#allocation17], 4
      %s162 = int_to_ptr.vmem [resolvable:$true] %s161
      %167 = dma.hbm_to_vmem [thread:$0]  %s160, 2048, %s162, [#allocation18], 128, 128, 8
    $region57: #{tpu_custom_call.1} parent=1 // pred_fallthru
      _
    // Predicated region
    $region58: #{tpu_custom_call.1} parent=1 // pred_check
      _
    $region59: #{tpu_custom_call.1} parent=1 // pred_check_branch
      %169 = sbr.rel (0) target = $region61
    $region60: #{tpu_custom_call.1} parent=1 // pred_region
      %171 = vsyncadd [#allocation18], 0
      %s172 = sshll.u32 %s14, 4
      %s173 = int_to_ptr.hbm [resolvable:$true] %s172
      %s174 = sshll.u32 [#allocation19], 4
      %s175 = int_to_ptr.vmem [resolvable:$true] %s174
      %180 = dma.hbm_to_vmem [thread:$0]  %s173, 2048, %s175, [#allocation18], 128, 128, 8
    $region61: #{tpu_custom_call.1} parent=1 // pred_fallthru
      _
    // Predicated region
    $region62: #{tpu_custom_call.1} parent=1 // pred_check
      _
    $region63: #{tpu_custom_call.1} parent=1 // pred_check_branch
      %182 = sbr.rel (0) target = $region65
    $region64: #{tpu_custom_call.1} parent=1 // pred_region
      _
    $region65: #{tpu_custom_call.1} parent=1 // pred_fallthru
      _
    // Predicated region
    $region66: #{tpu_custom_call.1} parent=1 // pred_check
      _
    $region67: #{tpu_custom_call.1} parent=1 // pred_check_branch
      %184 = sbr.rel (0) target = $region69
    $region68: #{tpu_custom_call.1} parent=1 // pred_region
      %186 = vsyncadd [#allocation21], 0
      %s187 = sshll.u32 %s16, 4
      %s188 = int_to_ptr.hbm [resolvable:$true] %s187
      %s189 = sshll.u32 [#allocation20], 4
      %s190 = int_to_ptr.vmem [resolvable:$true] %s189
      %195 = dma.hbm_to_vmem [thread:$0]  %s188, 2048, %s190, [#allocation21], 64, 64, 4
    $region69: #{tpu_custom_call.1} parent=1 // pred_fallthru
      _
    // Predicated region
    $region70: #{tpu_custom_call.1} parent=1 // pred_check
      _
    $region71: #{tpu_custom_call.1} parent=1 // pred_check_branch
      %197 = sbr.rel (0) target = $region73
    $region72: #{tpu_custom_call.1} parent=1 // pred_region
      %199 = vsyncadd [#allocation21], 0
      %s200 = sshll.u32 %s17, 4
      %s201 = int_to_ptr.hbm [resolvable:$true] %s200
      %s202 = sshll.u32 [#allocation22], 4
      %s203 = int_to_ptr.vmem [resolvable:$true] %s202
      %208 = dma.hbm_to_vmem [thread:$0]  %s201, 2048, %s203, [#allocation21], 64, 64, 4
    $region73: #{tpu_custom_call.1} parent=1 // pred_fallthru
      _
    // Predicated region
    $region74: #{tpu_custom_call.1} parent=1 // pred_check
      _
    $region75: #{tpu_custom_call.1} parent=1 // pred_check_branch
      %210 = sbr.rel (0) target = $region77
    $region76: #{tpu_custom_call.1} parent=1 // pred_region
      _
    $region77: #{tpu_custom_call.1} parent=1 // pred_fallthru
      _
    // Predicated region
    $region78: #{tpu_custom_call.1} parent=1 // pred_check
      _
    $region79: #{tpu_custom_call.1} parent=1 // pred_check_branch
      %212 = sbr.rel (0) target = $region81
    $region80: #{tpu_custom_call.1} parent=1 // pred_region
      %214 = dma.done [#allocation3], 128
    $region81: #{tpu_custom_call.1} parent=1 // pred_fallthru
      _
    // Predicated region
    $region82: #{tpu_custom_call.1} parent=1 // pred_check
      _
    $region83: #{tpu_custom_call.1} parent=1 // pred_check_branch
      %216 = sbr.rel (0) target = $region85
    $region84: #{tpu_custom_call.1} parent=1 // pred_region
      %218 = dma.done [#allocation6], 1024
    $region85: #{tpu_custom_call.1} parent=1 // pred_fallthru
      _
    // Predicated region
    $region86: #{tpu_custom_call.1} parent=1 // pred_check
      _
    $region87: #{tpu_custom_call.1} parent=1 // pred_check_branch
      %220 = sbr.rel (0) target = $region89
    $region88: #{tpu_custom_call.1} parent=1 // pred_region
      %222 = dma.done [#allocation6], 1024
    $region89: #{tpu_custom_call.1} parent=1 // pred_fallthru
      _
    // Predicated region
    $region90: #{tpu_custom_call.1} parent=1 // pred_check
      _
    $region91: #{tpu_custom_call.1} parent=1 // pred_check_branch
      %224 = sbr.rel (0) target = $region93
    $region92: #{tpu_custom_call.1} parent=1 // pred_region
      %226 = dma.done [#allocation9], 1024
    $region93: #{tpu_custom_call.1} parent=1 // pred_fallthru
      _
    // Predicated region
    $region94: #{tpu_custom_call.1} parent=1 // pred_check
      _
    $region95: #{tpu_custom_call.1} parent=1 // pred_check_branch
      %228 = sbr.rel (0) target = $region97
    $region96: #{tpu_custom_call.1} parent=1 // pred_region
      %230 = dma.done [#allocation9], 1024
    $region97: #{tpu_custom_call.1} parent=1 // pred_fallthru
      _
    // Predicated region
    $region98: #{tpu_custom_call.1} parent=1 // pred_check
      _
    $region99: #{tpu_custom_call.1} parent=1 // pred_check_branch
      %232 = sbr.rel (0) target = $region101
    $region100: #{tpu_custom_call.1} parent=1 // pred_region
      %234 = dma.done [#allocation12], 1024
    $region101: #{tpu_custom_call.1} parent=1 // pred_fallthru
      _
    // Predicated region
    $region102: #{tpu_custom_call.1} parent=1 // pred_check
      _
    $region103: #{tpu_custom_call.1} parent=1 // pred_check_branch
      %236 = sbr.rel (0) target = $region105
    $region104: #{tpu_custom_call.1} parent=1 // pred_region
      %238 = dma.done [#allocation12], 1024
    $region105: #{tpu_custom_call.1} parent=1 // pred_fallthru
      _
    // Predicated region
    $region106: #{tpu_custom_call.1} parent=1 // pred_check
      _
    $region107: #{tpu_custom_call.1} parent=1 // pred_check_branch
      %240 = sbr.rel (0) target = $region109
    $region108: #{tpu_custom_call.1} parent=1 // pred_region
      %242 = dma.done [#allocation15], 1024
    $region109: #{tpu_custom_call.1} parent=1 // pred_fallthru
      _
    // Predicated region
    $region110: #{tpu_custom_call.1} parent=1 // pred_check
      _
    $region111: #{tpu_custom_call.1} parent=1 // pred_check_branch
      %244 = sbr.rel (0) target = $region113
    $region112: #{tpu_custom_call.1} parent=1 // pred_region
      %246 = dma.done [#allocation15], 1024
    $region113: #{tpu_custom_call.1} parent=1 // pred_fallthru
      _
    // Predicated region
    $region114: #{tpu_custom_call.1} parent=1 // pred_check
      _
    $region115: #{tpu_custom_call.1} parent=1 // pred_check_branch
      %248 = sbr.rel (0) target = $region117
    $region116: #{tpu_custom_call.1} parent=1 // pred_region
      %250 = dma.done [#allocation18], 2048
    $region117: #{tpu_custom_call.1} parent=1 // pred_fallthru
      _
    // Predicated region
    $region118: #{tpu_custom_call.1} parent=1 // pred_check
      _
    $region119: #{tpu_custom_call.1} parent=1 // pred_check_branch
      %252 = sbr.rel (0) target = $region121
    $region120: #{tpu_custom_call.1} parent=1 // pred_region
      %254 = dma.done [#allocation18], 2048
    $region121: #{tpu_custom_call.1} parent=1 // pred_fallthru
      _
    // Predicated region
    $region122: #{tpu_custom_call.1} parent=1 // pred_check
      _
    $region123: #{tpu_custom_call.1} parent=1 // pred_check_branch
      %256 = sbr.rel (0) target = $region125
    $region124: #{tpu_custom_call.1} parent=1 // pred_region
      %258 = dma.done [#allocation21], 2048
    $region125: #{tpu_custom_call.1} parent=1 // pred_fallthru
      _
    // Predicated region
    $region126: #{tpu_custom_call.1} parent=1 // pred_check
      _
    $region127: #{tpu_custom_call.1} parent=1 // pred_check_branch
      %260 = sbr.rel (0) target = $region129
    $region128: #{tpu_custom_call.1} parent=1 // pred_region
      %262 = dma.done [#allocation21], 2048
    $region129: #{tpu_custom_call.1} parent=1 // pred_fallthru
      _
    %v263 = vld [vmem:[#allocation2] sm:$0xff]
    %v264 = vld [vmem:[#allocation5] sm:$0xf]
    %v265 = vld [vmem:[#allocation5 + $0x4] sm:$0xf]
    %v266 = vld [vmem:[#allocation5 + $0x8] sm:$0xf]
    %v267 = vld [vmem:[#allocation5 + $0xc] sm:$0xf]
    %v268 = vld [vmem:[#allocation5 + $0x10] sm:$0xf]
    %v269 = vld [vmem:[#allocation5 + $0x14] sm:$0xf]
    %v270 = vld [vmem:[#allocation5 + $0x18] sm:$0xf]
    %v271 = vld [vmem:[#allocation5 + $0x1c] sm:$0xf]
    %v272 = vld [vmem:[#allocation5 + $0x20] sm:$0xf]
    %v273 = vld [vmem:[#allocation5 + $0x24] sm:$0xf]
    %v274 = vld [vmem:[#allocation5 + $0x28] sm:$0xf]
    %v275 = vld [vmem:[#allocation5 + $0x2c] sm:$0xf]
    %v276 = vld [vmem:[#allocation5 + $0x30] sm:$0xf]
    %v277 = vld [vmem:[#allocation5 + $0x34] sm:$0xf]
    %v278 = vld [vmem:[#allocation5 + $0x38] sm:$0xf]
    %v279 = vld [vmem:[#allocation5 + $0x3c] sm:$0xf]
    %v280 = vld [vmem:[#allocation7] sm:$0xf]
    %v281 = vld [vmem:[#allocation7 + $0x4] sm:$0xf]
    %v282 = vld [vmem:[#allocation7 + $0x8] sm:$0xf]
    %v283 = vld [vmem:[#allocation7 + $0xc] sm:$0xf]
    %v284 = vld [vmem:[#allocation7 + $0x10] sm:$0xf]
    %v285 = vld [vmem:[#allocation7 + $0x14] sm:$0xf]
    %v286 = vld [vmem:[#allocation7 + $0x18] sm:$0xf]
    %v287 = vld [vmem:[#allocation7 + $0x1c] sm:$0xf]
    %v288 = vld [vmem:[#allocation7 + $0x20] sm:$0xf]
    %v289 = vld [vmem:[#allocation7 + $0x24] sm:$0xf]
    %v290 = vld [vmem:[#allocation7 + $0x28] sm:$0xf]
    %v291 = vld [vmem:[#allocation7 + $0x2c] sm:$0xf]
    %v292 = vld [vmem:[#allocation7 + $0x30] sm:$0xf]
    %v293 = vld [vmem:[#allocation7 + $0x34] sm:$0xf]
    %v294 = vld [vmem:[#allocation7 + $0x38] sm:$0xf]
    %v295 = vld [vmem:[#allocation7 + $0x3c] sm:$0xf]
    %v296 = vld [vmem:[%s3] sm:$0x1]
    %v297 = vpack.c.bf16 %v263, %v263
    %v298 = vunpack.c.l.bf16 %v297
    %v299 = vsub.f32 %v263, %v298
    %v300 = vpack.c.bf16 %v299, %v299
    %v317 = vunpack.c.l.b16 %v264
    %v318 = vunpack.c.l.b16 %v265
    %v319 = vunpack.c.l.b16 %v266
    %v320 = vunpack.c.l.b16 %v267
    %v321 = vunpack.c.l.b16 %v268
    %v322 = vunpack.c.l.b16 %v269
    %v323 = vunpack.c.l.b16 %v270
    %v324 = vunpack.c.l.b16 %v271
    %v325 = vunpack.c.l.b16 %v272
    %v326 = vunpack.c.l.b16 %v273
    %v327 = vunpack.c.l.b16 %v274
    %v328 = vunpack.c.l.b16 %v275
    %v329 = vunpack.c.l.b16 %v276
    %v330 = vunpack.c.l.b16 %v277
    %v331 = vunpack.c.l.b16 %v278
    %v332 = vunpack.c.l.b16 %v279
    %v333 = vpack.c.b16 %v318, %v317
    %v334 = vpack.c.b16 %v320, %v319
    %v335 = vpack.c.b16 %v322, %v321
    %v336 = vpack.c.b16 %v324, %v323
    %v337 = vpack.c.b16 %v326, %v325
    %v338 = vpack.c.b16 %v328, %v327
    %v339 = vpack.c.b16 %v330, %v329
    %v340 = vpack.c.b16 %v332, %v331
    %349 = vmatpush.bf16.msra.mxu0 %v340
    %350 = vmatpush.bf16.msra.mxu0 %v339
    %351 = vmatpush.bf16.msra.mxu0 %v338
    %352 = vmatpush.bf16.msra.mxu0 %v337
    %353 = vmatpush.bf16.msra.mxu0 %v336
    %354 = vmatpush.bf16.msra.mxu0 %v335
    %355 = vmatpush.bf16.msra.mxu0 %v334
    %356 = vmatpush.bf16.msra.mxu0 %v333
    %357 = vmatmul.bf16.gmra.mxu0 %v300
    %v358 = vpop.f32.mrf.mxu0
    %v359 = vadd.f32 0.0, %v358
    %v360 = vpop.f32.mrf.mxu0
    %361 = vdwg.mxu0
    %362 = vmatpush.bf16.msra.mxu0 %v340
    %363 = vmatpush.bf16.msra.mxu0 %v339
    %364 = vmatpush.bf16.msra.mxu0 %v338
    %365 = vmatpush.bf16.msra.mxu0 %v337
    %366 = vmatpush.bf16.msra.mxu0 %v336
    %367 = vmatpush.bf16.msra.mxu0 %v335
    %368 = vmatpush.bf16.msra.mxu0 %v334
    %369 = vmatpush.bf16.msra.mxu0 %v333
    %370 = vmatmul.bf16.gmra.mxu0 %v297
    %v371 = vpop.f32.mrf.mxu0
    %v372 = vadd.f32 %v359, %v371
    %v373 = vpop.f32.mrf.mxu0
    %374 = vdwg.mxu0
    %v391 = vunpack.c.l.b16 %v280
    %v392 = vunpack.c.l.b16 %v281
    %v393 = vunpack.c.l.b16 %v282
    %v394 = vunpack.c.l.b16 %v283
    %v395 = vunpack.c.l.b16 %v284
    %v396 = vunpack.c.l.b16 %v285
    %v397 = vunpack.c.l.b16 %v286
    %v398 = vunpack.c.l.b16 %v287
    %v399 = vunpack.c.l.b16 %v288
    %v400 = vunpack.c.l.b16 %v289
    %v401 = vunpack.c.l.b16 %v290
    %v402 = vunpack.c.l.b16 %v291
    %v403 = vunpack.c.l.b16 %v292
    %v404 = vunpack.c.l.b16 %v293
    %v405 = vunpack.c.l.b16 %v294
    %v406 = vunpack.c.l.b16 %v295
    %v407 = vpack.c.b16 %v392, %v391
    %v408 = vpack.c.b16 %v394, %v393
    %v409 = vpack.c.b16 %v396, %v395
    %v410 = vpack.c.b16 %v398, %v397
    %v411 = vpack.c.b16 %v400, %v399
    %v412 = vpack.c.b16 %v402, %v401
    %v413 = vpack.c.b16 %v404, %v403
    %v414 = vpack.c.b16 %v406, %v405
    %423 = vmatpush.bf16.msra.mxu0 %v414
    %424 = vmatpush.bf16.msra.mxu0 %v413
    %425 = vmatpush.bf16.msra.mxu0 %v412
    %426 = vmatpush.bf16.msra.mxu0 %v411
    %427 = vmatpush.bf16.msra.mxu0 %v410
    %428 = vmatpush.bf16.msra.mxu0 %v409
    %429 = vmatpush.bf16.msra.mxu0 %v408
    %430 = vmatpush.bf16.msra.mxu0 %v407
    %431 = vmatmul.bf16.gmra.mxu0 %v297
    %v432 = vpop.f32.mrf.mxu0
    %v433 = vadd.f32 0.0, %v432
    %v434 = vpop.f32.mrf.mxu0
    %435 = vdwg.mxu0
    %v436 = vadd.f32 %v372, %v433
    %v438 = vperm.slane %v296, 0
    %v440 = vadd.f32 %v436, %v438
    %v441 = vmax.f32 %v440, 0.0
    %v442 = vld [vmem:[#allocation8] sm:$0xf]
    %v443 = vld [vmem:[#allocation8 + $0x4] sm:$0xf]
    %v444 = vld [vmem:[#allocation8 + $0x8] sm:$0xf]
    %v445 = vld [vmem:[#allocation8 + $0xc] sm:$0xf]
    %v446 = vld [vmem:[#allocation8 + $0x10] sm:$0xf]
    %v447 = vld [vmem:[#allocation8 + $0x14] sm:$0xf]
    %v448 = vld [vmem:[#allocation8 + $0x18] sm:$0xf]
    %v449 = vld [vmem:[#allocation8 + $0x1c] sm:$0xf]
    %v450 = vld [vmem:[#allocation8 + $0x20] sm:$0xf]
    %v451 = vld [vmem:[#allocation8 + $0x24] sm:$0xf]
    %v452 = vld [vmem:[#allocation8 + $0x28] sm:$0xf]
    %v453 = vld [vmem:[#allocation8 + $0x2c] sm:$0xf]
    %v454 = vld [vmem:[#allocation8 + $0x30] sm:$0xf]
    %v455 = vld [vmem:[#allocation8 + $0x34] sm:$0xf]
    %v456 = vld [vmem:[#allocation8 + $0x38] sm:$0xf]
    %v457 = vld [vmem:[#allocation8 + $0x3c] sm:$0xf]
    %v458 = vld [vmem:[#allocation10] sm:$0xf]
    %v459 = vld [vmem:[#allocation10 + $0x4] sm:$0xf]
    %v460 = vld [vmem:[#allocation10 + $0x8] sm:$0xf]
    %v461 = vld [vmem:[#allocation10 + $0xc] sm:$0xf]
    %v462 = vld [vmem:[#allocation10 + $0x10] sm:$0xf]
    %v463 = vld [vmem:[#allocation10 + $0x14] sm:$0xf]
    %v464 = vld [vmem:[#allocation10 + $0x18] sm:$0xf]
    %v465 = vld [vmem:[#allocation10 + $0x1c] sm:$0xf]
    %v466 = vld [vmem:[#allocation10 + $0x20] sm:$0xf]
    %v467 = vld [vmem:[#allocation10 + $0x24] sm:$0xf]
    %v468 = vld [vmem:[#allocation10 + $0x28] sm:$0xf]
    %v469 = vld [vmem:[#allocation10 + $0x2c] sm:$0xf]
    %v470 = vld [vmem:[#allocation10 + $0x30] sm:$0xf]
    %v471 = vld [vmem:[#allocation10 + $0x34] sm:$0xf]
    %v472 = vld [vmem:[#allocation10 + $0x38] sm:$0xf]
    %v473 = vld [vmem:[#allocation10 + $0x3c] sm:$0xf]
    %v474 = vld [vmem:[%s6] sm:$0x1]
    %v475 = vpack.c.bf16 %v441, %v441
    %v476 = vunpack.c.l.bf16 %v475
    %v477 = vsub.f32 %v441, %v476
    %v478 = vpack.c.bf16 %v477, %v477
    %v495 = vunpack.c.l.b16 %v442
    %v496 = vunpack.c.l.b16 %v443
    %v497 = vunpack.c.l.b16 %v444
    %v498 = vunpack.c.l.b16 %v445
    %v499 = vunpack.c.l.b16 %v446
    %v500 = vunpack.c.l.b16 %v447
    %v501 = vunpack.c.l.b16 %v448
    %v502 = vunpack.c.l.b16 %v449
    %v503 = vunpack.c.l.b16 %v450
    %v504 = vunpack.c.l.b16 %v451
    %v505 = vunpack.c.l.b16 %v452
    %v506 = vunpack.c.l.b16 %v453
    %v507 = vunpack.c.l.b16 %v454
    %v508 = vunpack.c.l.b16 %v455
    %v509 = vunpack.c.l.b16 %v456
    %v510 = vunpack.c.l.b16 %v457
    %v511 = vpack.c.b16 %v496, %v495
    %v512 = vpack.c.b16 %v498, %v497
    %v513 = vpack.c.b16 %v500, %v499
    %v514 = vpack.c.b16 %v502, %v501
    %v515 = vpack.c.b16 %v504, %v503
    %v516 = vpack.c.b16 %v506, %v505
    %v517 = vpack.c.b16 %v508, %v507
    %v518 = vpack.c.b16 %v510, %v509
    %527 = vmatpush.bf16.msra.mxu0 %v518
    %528 = vmatpush.bf16.msra.mxu0 %v517
    %529 = vmatpush.bf16.msra.mxu0 %v516
    %530 = vmatpush.bf16.msra.mxu0 %v515
    %531 = vmatpush.bf16.msra.mxu0 %v514
    %532 = vmatpush.bf16.msra.mxu0 %v513
    %533 = vmatpush.bf16.msra.mxu0 %v512
    %534 = vmatpush.bf16.msra.mxu0 %v511
    %535 = vmatmul.bf16.gmra.mxu0 %v478
    %v536 = vpop.f32.mrf.mxu0
    %v537 = vadd.f32 0.0, %v536
    %v538 = vpop.f32.mrf.mxu0
    %539 = vdwg.mxu0
    %540 = vmatpush.bf16.msra.mxu0 %v518
    %541 = vmatpush.bf16.msra.mxu0 %v517
    %542 = vmatpush.bf16.msra.mxu0 %v516
    %543 = vmatpush.bf16.msra.mxu0 %v515
    %544 = vmatpush.bf16.msra.mxu0 %v514
    %545 = vmatpush.bf16.msra.mxu0 %v513
    %546 = vmatpush.bf16.msra.mxu0 %v512
    %547 = vmatpush.bf16.msra.mxu0 %v511
    %548 = vmatmul.bf16.gmra.mxu0 %v475
    %v549 = vpop.f32.mrf.mxu0
    %v550 = vadd.f32 %v537, %v549
    %v551 = vpop.f32.mrf.mxu0
    %552 = vdwg.mxu0
    %v569 = vunpack.c.l.b16 %v458
    %v570 = vunpack.c.l.b16 %v459
    %v571 = vunpack.c.l.b16 %v460
    %v572 = vunpack.c.l.b16 %v461
    %v573 = vunpack.c.l.b16 %v462
    %v574 = vunpack.c.l.b16 %v463
    %v575 = vunpack.c.l.b16 %v464
    %v576 = vunpack.c.l.b16 %v465
    %v577 = vunpack.c.l.b16 %v466
    %v578 = vunpack.c.l.b16 %v467
    %v579 = vunpack.c.l.b16 %v468
    %v580 = vunpack.c.l.b16 %v469
    %v581 = vunpack.c.l.b16 %v470
    %v582 = vunpack.c.l.b16 %v471
    %v583 = vunpack.c.l.b16 %v472
    %v584 = vunpack.c.l.b16 %v473
    %v585 = vpack.c.b16 %v570, %v569
    %v586 = vpack.c.b16 %v572, %v571
    %v587 = vpack.c.b16 %v574, %v573
    %v588 = vpack.c.b16 %v576, %v575
    %v589 = vpack.c.b16 %v578, %v577
    %v590 = vpack.c.b16 %v580, %v579
    %v591 = vpack.c.b16 %v582, %v581
    %v592 = vpack.c.b16 %v584, %v583
    %601 = vmatpush.bf16.msra.mxu0 %v592
    %602 = vmatpush.bf16.msra.mxu0 %v591
    %603 = vmatpush.bf16.msra.mxu0 %v590
    %604 = vmatpush.bf16.msra.mxu0 %v589
    %605 = vmatpush.bf16.msra.mxu0 %v588
    %606 = vmatpush.bf16.msra.mxu0 %v587
    %607 = vmatpush.bf16.msra.mxu0 %v586
    %608 = vmatpush.bf16.msra.mxu0 %v585
    %609 = vmatmul.bf16.gmra.mxu0 %v475
    %v610 = vpop.f32.mrf.mxu0
    %v611 = vadd.f32 0.0, %v610
    %v612 = vpop.f32.mrf.mxu0
    %613 = vdwg.mxu0
    %v614 = vadd.f32 %v550, %v611
    %v616 = vperm.slane %v474, 0
    %v618 = vadd.f32 %v614, %v616
    %v619 = vmax.f32 %v618, 0.0
    %v620 = vld [vmem:[#allocation11] sm:$0xf]
    %v621 = vld [vmem:[#allocation11 + $0x4] sm:$0xf]
    %v622 = vld [vmem:[#allocation11 + $0x8] sm:$0xf]
    %v623 = vld [vmem:[#allocation11 + $0xc] sm:$0xf]
    %v624 = vld [vmem:[#allocation11 + $0x10] sm:$0xf]
    %v625 = vld [vmem:[#allocation11 + $0x14] sm:$0xf]
    %v626 = vld [vmem:[#allocation11 + $0x18] sm:$0xf]
    %v627 = vld [vmem:[#allocation11 + $0x1c] sm:$0xf]
    %v628 = vld [vmem:[#allocation11 + $0x20] sm:$0xf]
    %v629 = vld [vmem:[#allocation11 + $0x24] sm:$0xf]
    %v630 = vld [vmem:[#allocation11 + $0x28] sm:$0xf]
    %v631 = vld [vmem:[#allocation11 + $0x2c] sm:$0xf]
    %v632 = vld [vmem:[#allocation11 + $0x30] sm:$0xf]
    %v633 = vld [vmem:[#allocation11 + $0x34] sm:$0xf]
    %v634 = vld [vmem:[#allocation11 + $0x38] sm:$0xf]
    %v635 = vld [vmem:[#allocation11 + $0x3c] sm:$0xf]
    %v636 = vld [vmem:[#allocation13] sm:$0xf]
    %v637 = vld [vmem:[#allocation13 + $0x4] sm:$0xf]
    %v638 = vld [vmem:[#allocation13 + $0x8] sm:$0xf]
    %v639 = vld [vmem:[#allocation13 + $0xc] sm:$0xf]
    %v640 = vld [vmem:[#allocation13 + $0x10] sm:$0xf]
    %v641 = vld [vmem:[#allocation13 + $0x14] sm:$0xf]
    %v642 = vld [vmem:[#allocation13 + $0x18] sm:$0xf]
    %v643 = vld [vmem:[#allocation13 + $0x1c] sm:$0xf]
    %v644 = vld [vmem:[#allocation13 + $0x20] sm:$0xf]
    %v645 = vld [vmem:[#allocation13 + $0x24] sm:$0xf]
    %v646 = vld [vmem:[#allocation13 + $0x28] sm:$0xf]
    %v647 = vld [vmem:[#allocation13 + $0x2c] sm:$0xf]
    %v648 = vld [vmem:[#allocation13 + $0x30] sm:$0xf]
    %v649 = vld [vmem:[#allocation13 + $0x34] sm:$0xf]
    %v650 = vld [vmem:[#allocation13 + $0x38] sm:$0xf]
    %v651 = vld [vmem:[#allocation13 + $0x3c] sm:$0xf]
    %v652 = vld [vmem:[%s9] sm:$0x1]
    %v653 = vpack.c.bf16 %v619, %v619
    %v654 = vunpack.c.l.bf16 %v653
    %v655 = vsub.f32 %v619, %v654
    %v656 = vpack.c.bf16 %v655, %v655
    %v673 = vunpack.c.l.b16 %v620
    %v674 = vunpack.c.l.b16 %v621
    %v675 = vunpack.c.l.b16 %v622
    %v676 = vunpack.c.l.b16 %v623
    %v677 = vunpack.c.l.b16 %v624
    %v678 = vunpack.c.l.b16 %v625
    %v679 = vunpack.c.l.b16 %v626
    %v680 = vunpack.c.l.b16 %v627
    %v681 = vunpack.c.l.b16 %v628
    %v682 = vunpack.c.l.b16 %v629
    %v683 = vunpack.c.l.b16 %v630
    %v684 = vunpack.c.l.b16 %v631
    %v685 = vunpack.c.l.b16 %v632
    %v686 = vunpack.c.l.b16 %v633
    %v687 = vunpack.c.l.b16 %v634
    %v688 = vunpack.c.l.b16 %v635
    %v689 = vpack.c.b16 %v674, %v673
    %v690 = vpack.c.b16 %v676, %v675
    %v691 = vpack.c.b16 %v678, %v677
    %v692 = vpack.c.b16 %v680, %v679
    %v693 = vpack.c.b16 %v682, %v681
    %v694 = vpack.c.b16 %v684, %v683
    %v695 = vpack.c.b16 %v686, %v685
    %v696 = vpack.c.b16 %v688, %v687
    %705 = vmatpush.bf16.msra.mxu0 %v696
    %706 = vmatpush.bf16.msra.mxu0 %v695
    %707 = vmatpush.bf16.msra.mxu0 %v694
    %708 = vmatpush.bf16.msra.mxu0 %v693
    %709 = vmatpush.bf16.msra.mxu0 %v692
    %710 = vmatpush.bf16.msra.mxu0 %v691
    %711 = vmatpush.bf16.msra.mxu0 %v690
    %712 = vmatpush.bf16.msra.mxu0 %v689
    %713 = vmatmul.bf16.gmra.mxu0 %v656
    %v714 = vpop.f32.mrf.mxu0
    %v715 = vadd.f32 0.0, %v714
    %v716 = vpop.f32.mrf.mxu0
    %717 = vdwg.mxu0
    %718 = vmatpush.bf16.msra.mxu0 %v696
    %719 = vmatpush.bf16.msra.mxu0 %v695
    %720 = vmatpush.bf16.msra.mxu0 %v694
    %721 = vmatpush.bf16.msra.mxu0 %v693
    %722 = vmatpush.bf16.msra.mxu0 %v692
    %723 = vmatpush.bf16.msra.mxu0 %v691
    %724 = vmatpush.bf16.msra.mxu0 %v690
    %725 = vmatpush.bf16.msra.mxu0 %v689
    %726 = vmatmul.bf16.gmra.mxu0 %v653
    %v727 = vpop.f32.mrf.mxu0
    %v728 = vadd.f32 %v715, %v727
    %v729 = vpop.f32.mrf.mxu0
    %730 = vdwg.mxu0
    %v747 = vunpack.c.l.b16 %v636
    %v748 = vunpack.c.l.b16 %v637
    %v749 = vunpack.c.l.b16 %v638
    %v750 = vunpack.c.l.b16 %v639
    %v751 = vunpack.c.l.b16 %v640
    %v752 = vunpack.c.l.b16 %v641
    %v753 = vunpack.c.l.b16 %v642
    %v754 = vunpack.c.l.b16 %v643
    %v755 = vunpack.c.l.b16 %v644
    %v756 = vunpack.c.l.b16 %v645
    %v757 = vunpack.c.l.b16 %v646
    %v758 = vunpack.c.l.b16 %v647
    %v759 = vunpack.c.l.b16 %v648
    %v760 = vunpack.c.l.b16 %v649
    %v761 = vunpack.c.l.b16 %v650
    %v762 = vunpack.c.l.b16 %v651
    %v763 = vpack.c.b16 %v748, %v747
    %v764 = vpack.c.b16 %v750, %v749
    %v765 = vpack.c.b16 %v752, %v751
    %v766 = vpack.c.b16 %v754, %v753
    %v767 = vpack.c.b16 %v756, %v755
    %v768 = vpack.c.b16 %v758, %v757
    %v769 = vpack.c.b16 %v760, %v759
    %v770 = vpack.c.b16 %v762, %v761
    %779 = vmatpush.bf16.msra.mxu0 %v770
    %780 = vmatpush.bf16.msra.mxu0 %v769
    %781 = vmatpush.bf16.msra.mxu0 %v768
    %782 = vmatpush.bf16.msra.mxu0 %v767
    %783 = vmatpush.bf16.msra.mxu0 %v766
    %784 = vmatpush.bf16.msra.mxu0 %v765
    %785 = vmatpush.bf16.msra.mxu0 %v764
    %786 = vmatpush.bf16.msra.mxu0 %v763
    %787 = vmatmul.bf16.gmra.mxu0 %v653
    %v788 = vpop.f32.mrf.mxu0
    %v789 = vadd.f32 0.0, %v788
    %v790 = vpop.f32.mrf.mxu0
    %791 = vdwg.mxu0
    %v792 = vadd.f32 %v728, %v789
    %v794 = vperm.slane %v652, 0
    %v796 = vadd.f32 %v792, %v794
    %v797 = vmax.f32 %v796, 0.0
    %v798 = vld [vmem:[#allocation14] sm:$0xf]
    %v799 = vld [vmem:[#allocation14 + $0x4] sm:$0xf]
    %v800 = vld [vmem:[#allocation14 + $0x8] sm:$0xf]
    %v801 = vld [vmem:[#allocation14 + $0xc] sm:$0xf]
    %v802 = vld [vmem:[#allocation14 + $0x10] sm:$0xf]
    %v803 = vld [vmem:[#allocation14 + $0x14] sm:$0xf]
    %v804 = vld [vmem:[#allocation14 + $0x18] sm:$0xf]
    %v805 = vld [vmem:[#allocation14 + $0x1c] sm:$0xf]
    %v806 = vld [vmem:[#allocation14 + $0x20] sm:$0xf]
    %v807 = vld [vmem:[#allocation14 + $0x24] sm:$0xf]
    %v808 = vld [vmem:[#allocation14 + $0x28] sm:$0xf]
    %v809 = vld [vmem:[#allocation14 + $0x2c] sm:$0xf]
    %v810 = vld [vmem:[#allocation14 + $0x30] sm:$0xf]
    %v811 = vld [vmem:[#allocation14 + $0x34] sm:$0xf]
    %v812 = vld [vmem:[#allocation14 + $0x38] sm:$0xf]
    %v813 = vld [vmem:[#allocation14 + $0x3c] sm:$0xf]
    %v814 = vld [vmem:[#allocation16] sm:$0xf]
    %v815 = vld [vmem:[#allocation16 + $0x4] sm:$0xf]
    %v816 = vld [vmem:[#allocation16 + $0x8] sm:$0xf]
    %v817 = vld [vmem:[#allocation16 + $0xc] sm:$0xf]
    %v818 = vld [vmem:[#allocation16 + $0x10] sm:$0xf]
    %v819 = vld [vmem:[#allocation16 + $0x14] sm:$0xf]
    %v820 = vld [vmem:[#allocation16 + $0x18] sm:$0xf]
    %v821 = vld [vmem:[#allocation16 + $0x1c] sm:$0xf]
    %v822 = vld [vmem:[#allocation16 + $0x20] sm:$0xf]
    %v823 = vld [vmem:[#allocation16 + $0x24] sm:$0xf]
    %v824 = vld [vmem:[#allocation16 + $0x28] sm:$0xf]
    %v825 = vld [vmem:[#allocation16 + $0x2c] sm:$0xf]
    %v826 = vld [vmem:[#allocation16 + $0x30] sm:$0xf]
    %v827 = vld [vmem:[#allocation16 + $0x34] sm:$0xf]
    %v828 = vld [vmem:[#allocation16 + $0x38] sm:$0xf]
    %v829 = vld [vmem:[#allocation16 + $0x3c] sm:$0xf]
    %v830 = vld [vmem:[%s12] sm:$0x1]
    %v831 = vpack.c.bf16 %v797, %v797
    %v832 = vunpack.c.l.bf16 %v831
    %v833 = vsub.f32 %v797, %v832
    %v834 = vpack.c.bf16 %v833, %v833
    %v851 = vunpack.c.l.b16 %v798
    %v852 = vunpack.c.l.b16 %v799
    %v853 = vunpack.c.l.b16 %v800
    %v854 = vunpack.c.l.b16 %v801
    %v855 = vunpack.c.l.b16 %v802
    %v856 = vunpack.c.l.b16 %v803
    %v857 = vunpack.c.l.b16 %v804
    %v858 = vunpack.c.l.b16 %v805
    %v859 = vunpack.c.l.b16 %v806
    %v860 = vunpack.c.l.b16 %v807
    %v861 = vunpack.c.l.b16 %v808
    %v862 = vunpack.c.l.b16 %v809
    %v863 = vunpack.c.l.b16 %v810
    %v864 = vunpack.c.l.b16 %v811
    %v865 = vunpack.c.l.b16 %v812
    %v866 = vunpack.c.l.b16 %v813
    %v867 = vpack.c.b16 %v852, %v851
    %v868 = vpack.c.b16 %v854, %v853
    %v869 = vpack.c.b16 %v856, %v855
    %v870 = vpack.c.b16 %v858, %v857
    %v871 = vpack.c.b16 %v860, %v859
    %v872 = vpack.c.b16 %v862, %v861
    %v873 = vpack.c.b16 %v864, %v863
    %v874 = vpack.c.b16 %v866, %v865
    %883 = vmatpush.bf16.msra.mxu0 %v874
    %884 = vmatpush.bf16.msra.mxu0 %v873
    %885 = vmatpush.bf16.msra.mxu0 %v872
    %886 = vmatpush.bf16.msra.mxu0 %v871
    %887 = vmatpush.bf16.msra.mxu0 %v870
    %888 = vmatpush.bf16.msra.mxu0 %v869
    %889 = vmatpush.bf16.msra.mxu0 %v868
    %890 = vmatpush.bf16.msra.mxu0 %v867
    %891 = vmatmul.bf16.gmra.mxu0 %v834
    %v892 = vpop.f32.mrf.mxu0
    %v893 = vadd.f32 0.0, %v892
    %v894 = vpop.f32.mrf.mxu0
    %895 = vdwg.mxu0
    %896 = vmatpush.bf16.msra.mxu0 %v874
    %897 = vmatpush.bf16.msra.mxu0 %v873
    %898 = vmatpush.bf16.msra.mxu0 %v872
    %899 = vmatpush.bf16.msra.mxu0 %v871
    %900 = vmatpush.bf16.msra.mxu0 %v870
    %901 = vmatpush.bf16.msra.mxu0 %v869
    %902 = vmatpush.bf16.msra.mxu0 %v868
    %903 = vmatpush.bf16.msra.mxu0 %v867
    %904 = vmatmul.bf16.gmra.mxu0 %v831
    %v905 = vpop.f32.mrf.mxu0
    %v906 = vadd.f32 %v893, %v905
    %v907 = vpop.f32.mrf.mxu0
    %908 = vdwg.mxu0
    %v925 = vunpack.c.l.b16 %v814
    %v926 = vunpack.c.l.b16 %v815
    %v927 = vunpack.c.l.b16 %v816
    %v928 = vunpack.c.l.b16 %v817
    %v929 = vunpack.c.l.b16 %v818
    %v930 = vunpack.c.l.b16 %v819
    %v931 = vunpack.c.l.b16 %v820
    %v932 = vunpack.c.l.b16 %v821
    %v933 = vunpack.c.l.b16 %v822
    %v934 = vunpack.c.l.b16 %v823
    %v935 = vunpack.c.l.b16 %v824
    %v936 = vunpack.c.l.b16 %v825
    %v937 = vunpack.c.l.b16 %v826
    %v938 = vunpack.c.l.b16 %v827
    %v939 = vunpack.c.l.b16 %v828
    %v940 = vunpack.c.l.b16 %v829
    %v941 = vpack.c.b16 %v926, %v925
    %v942 = vpack.c.b16 %v928, %v927
    %v943 = vpack.c.b16 %v930, %v929
    %v944 = vpack.c.b16 %v932, %v931
    %v945 = vpack.c.b16 %v934, %v933
    %v946 = vpack.c.b16 %v936, %v935
    %v947 = vpack.c.b16 %v938, %v937
    %v948 = vpack.c.b16 %v940, %v939
    %957 = vmatpush.bf16.msra.mxu0 %v948
    %958 = vmatpush.bf16.msra.mxu0 %v947
    %959 = vmatpush.bf16.msra.mxu0 %v946
    %960 = vmatpush.bf16.msra.mxu0 %v945
    %961 = vmatpush.bf16.msra.mxu0 %v944
    %962 = vmatpush.bf16.msra.mxu0 %v943
    %963 = vmatpush.bf16.msra.mxu0 %v942
    %964 = vmatpush.bf16.msra.mxu0 %v941
    %965 = vmatmul.bf16.gmra.mxu0 %v831
    %v966 = vpop.f32.mrf.mxu0
    %v967 = vadd.f32 0.0, %v966
    %v968 = vpop.f32.mrf.mxu0
    %969 = vdwg.mxu0
    %v970 = vadd.f32 %v906, %v967
    %v972 = vperm.slane %v830, 0
    %v974 = vadd.f32 %v970, %v972
    %v975 = vmax.f32 %v974, 0.0
    %v976 = vld [vmem:[#allocation17] sm:$0xff]
    %v977 = vld [vmem:[#allocation17 + $0x8] sm:$0xff]
    %v978 = vld [vmem:[#allocation17 + $0x10] sm:$0xff]
    %v979 = vld [vmem:[#allocation17 + $0x18] sm:$0xff]
    %v980 = vld [vmem:[#allocation17 + $0x20] sm:$0xff]
    %v981 = vld [vmem:[#allocation17 + $0x28] sm:$0xff]
    %v982 = vld [vmem:[#allocation17 + $0x30] sm:$0xff]
    %v983 = vld [vmem:[#allocation17 + $0x38] sm:$0xff]
    %v984 = vld [vmem:[#allocation17 + $0x40] sm:$0xff]
    %v985 = vld [vmem:[#allocation17 + $0x48] sm:$0xff]
    %v986 = vld [vmem:[#allocation17 + $0x50] sm:$0xff]
    %v987 = vld [vmem:[#allocation17 + $0x58] sm:$0xff]
    %v988 = vld [vmem:[#allocation17 + $0x60] sm:$0xff]
    %v989 = vld [vmem:[#allocation17 + $0x68] sm:$0xff]
    %v990 = vld [vmem:[#allocation17 + $0x70] sm:$0xff]
    %v991 = vld [vmem:[#allocation17 + $0x78] sm:$0xff]
    %v992 = vld [vmem:[#allocation19] sm:$0xff]
    %v993 = vld [vmem:[#allocation19 + $0x8] sm:$0xff]
    %v994 = vld [vmem:[#allocation19 + $0x10] sm:$0xff]
    %v995 = vld [vmem:[#allocation19 + $0x18] sm:$0xff]
    %v996 = vld [vmem:[#allocation19 + $0x20] sm:$0xff]
    %v997 = vld [vmem:[#allocation19 + $0x28] sm:$0xff]
    %v998 = vld [vmem:[#allocation19 + $0x30] sm:$0xff]
    %v999 = vld [vmem:[#allocation19 + $0x38] sm:$0xff]
    %v1000 = vld [vmem:[#allocation19 + $0x40] sm:$0xff]
    %v1001 = vld [vmem:[#allocation19 + $0x48] sm:$0xff]
    %v1002 = vld [vmem:[#allocation19 + $0x50] sm:$0xff]
    %v1003 = vld [vmem:[#allocation19 + $0x58] sm:$0xff]
    %v1004 = vld [vmem:[#allocation19 + $0x60] sm:$0xff]
    %v1005 = vld [vmem:[#allocation19 + $0x68] sm:$0xff]
    %v1006 = vld [vmem:[#allocation19 + $0x70] sm:$0xff]
    %v1007 = vld [vmem:[#allocation19 + $0x78] sm:$0xff]
    %v1008 = vld [vmem:[%s15] sm:$0x3]
    %v1009 = vpack.c.bf16 %v975, %v975
    %v1010 = vunpack.c.l.bf16 %v1009
    %v1011 = vsub.f32 %v975, %v1010
    %v1012 = vpack.c.bf16 %v1011, %v1011
    %v1029 = vunpack.c.l.b16 %v976
    %v1030 = vunpack.c.h.b16 %v976
    %v1031 = vunpack.c.l.b16 %v977
    %v1032 = vunpack.c.h.b16 %v977
    %v1033 = vunpack.c.l.b16 %v978
    %v1034 = vunpack.c.h.b16 %v978
    %v1035 = vunpack.c.l.b16 %v979
    %v1036 = vunpack.c.h.b16 %v979
    %v1037 = vunpack.c.l.b16 %v980
    %v1038 = vunpack.c.h.b16 %v980
    %v1039 = vunpack.c.l.b16 %v981
    %v1040 = vunpack.c.h.b16 %v981
    %v1041 = vunpack.c.l.b16 %v982
    %v1042 = vunpack.c.h.b16 %v982
    %v1043 = vunpack.c.l.b16 %v983
    %v1044 = vunpack.c.h.b16 %v983
    %v1045 = vunpack.c.l.b16 %v984
    %v1046 = vunpack.c.h.b16 %v984
    %v1047 = vunpack.c.l.b16 %v985
    %v1048 = vunpack.c.h.b16 %v985
    %v1049 = vunpack.c.l.b16 %v986
    %v1050 = vunpack.c.h.b16 %v986
    %v1051 = vunpack.c.l.b16 %v987
    %v1052 = vunpack.c.h.b16 %v987
    %v1053 = vunpack.c.l.b16 %v988
    %v1054 = vunpack.c.h.b16 %v988
    %v1055 = vunpack.c.l.b16 %v989
    %v1056 = vunpack.c.h.b16 %v989
    %v1057 = vunpack.c.l.b16 %v990
    %v1058 = vunpack.c.h.b16 %v990
    %v1059 = vunpack.c.l.b16 %v991
    %v1060 = vunpack.c.h.b16 %v991
    %v1061 = vpack.c.b16 %v1031, %v1029
    %v1062 = vpack.c.b16 %v1032, %v1030
    %v1063 = vpack.c.b16 %v1035, %v1033
    %v1064 = vpack.c.b16 %v1036, %v1034
    %v1065 = vpack.c.b16 %v1039, %v1037
    %v1066 = vpack.c.b16 %v1040, %v1038
    %v1067 = vpack.c.b16 %v1043, %v1041
    %v1068 = vpack.c.b16 %v1044, %v1042
    %v1069 = vpack.c.b16 %v1047, %v1045
    %v1070 = vpack.c.b16 %v1048, %v1046
    %v1071 = vpack.c.b16 %v1051, %v1049
    %v1072 = vpack.c.b16 %v1052, %v1050
    %v1073 = vpack.c.b16 %v1055, %v1053
    %v1074 = vpack.c.b16 %v1056, %v1054
    %v1075 = vpack.c.b16 %v1059, %v1057
    %v1076 = vpack.c.b16 %v1060, %v1058
    %1093 = vmatpush.bf16.msra.mxu0 %v1075
    %1094 = vmatpush.bf16.msra.mxu0 %v1073
    %1095 = vmatpush.bf16.msra.mxu0 %v1071
    %1096 = vmatpush.bf16.msra.mxu0 %v1069
    %1097 = vmatpush.bf16.msra.mxu0 %v1067
    %1098 = vmatpush.bf16.msra.mxu0 %v1065
    %1099 = vmatpush.bf16.msra.mxu0 %v1063
    %1100 = vmatpush.bf16.msra.mxu0 %v1061
    %1101 = vmatmul.bf16.gmra.mxu0 %v1012
    %v1102 = vpop.f32.mrf.mxu0
    %v1103 = vadd.f32 0.0, %v1102
    %v1104 = vpop.f32.mrf.mxu0
    %1105 = vdwg.mxu0
    %1106 = vmatpush.bf16.msra.mxu0 %v1076
    %1107 = vmatpush.bf16.msra.mxu0 %v1074
    %1108 = vmatpush.bf16.msra.mxu0 %v1072
    %1109 = vmatpush.bf16.msra.mxu0 %v1070
    %1110 = vmatpush.bf16.msra.mxu0 %v1068
    %1111 = vmatpush.bf16.msra.mxu0 %v1066
    %1112 = vmatpush.bf16.msra.mxu0 %v1064
    %1113 = vmatpush.bf16.msra.mxu0 %v1062
    %1114 = vmatmul.bf16.gmra.mxu0 %v1012
    %v1115 = vpop.f32.mrf.mxu0
    %v1116 = vadd.f32 0.0, %v1115
    %v1117 = vpop.f32.mrf.mxu0
    %1118 = vdwg.mxu0
    %1119 = vmatpush.bf16.msra.mxu0 %v1075
    %1120 = vmatpush.bf16.msra.mxu0 %v1073
    %1121 = vmatpush.bf16.msra.mxu0 %v1071
    %1122 = vmatpush.bf16.msra.mxu0 %v1069
    %1123 = vmatpush.bf16.msra.mxu0 %v1067
    %1124 = vmatpush.bf16.msra.mxu0 %v1065
    %1125 = vmatpush.bf16.msra.mxu0 %v1063
    %1126 = vmatpush.bf16.msra.mxu0 %v1061
    %1127 = vmatmul.bf16.gmra.mxu0 %v1009
    %v1128 = vpop.f32.mrf.mxu0
    %v1129 = vadd.f32 %v1103, %v1128
    %v1130 = vpop.f32.mrf.mxu0
    %1131 = vdwg.mxu0
    %1132 = vmatpush.bf16.msra.mxu0 %v1076
    %1133 = vmatpush.bf16.msra.mxu0 %v1074
    %1134 = vmatpush.bf16.msra.mxu0 %v1072
    %1135 = vmatpush.bf16.msra.mxu0 %v1070
    %1136 = vmatpush.bf16.msra.mxu0 %v1068
    %1137 = vmatpush.bf16.msra.mxu0 %v1066
    %1138 = vmatpush.bf16.msra.mxu0 %v1064
    %1139 = vmatpush.bf16.msra.mxu0 %v1062
    %1140 = vmatmul.bf16.gmra.mxu0 %v1009
    %v1141 = vpop.f32.mrf.mxu0
    %v1142 = vadd.f32 %v1116, %v1141
    %v1143 = vpop.f32.mrf.mxu0
    %1144 = vdwg.mxu0
    %v1161 = vunpack.c.l.b16 %v992
    %v1162 = vunpack.c.h.b16 %v992
    %v1163 = vunpack.c.l.b16 %v993
    %v1164 = vunpack.c.h.b16 %v993
    %v1165 = vunpack.c.l.b16 %v994
    %v1166 = vunpack.c.h.b16 %v994
    %v1167 = vunpack.c.l.b16 %v995
    %v1168 = vunpack.c.h.b16 %v995
    %v1169 = vunpack.c.l.b16 %v996
    %v1170 = vunpack.c.h.b16 %v996
    %v1171 = vunpack.c.l.b16 %v997
    %v1172 = vunpack.c.h.b16 %v997
    %v1173 = vunpack.c.l.b16 %v998
    %v1174 = vunpack.c.h.b16 %v998
    %v1175 = vunpack.c.l.b16 %v999
    %v1176 = vunpack.c.h.b16 %v999
    %v1177 = vunpack.c.l.b16 %v1000
    %v1178 = vunpack.c.h.b16 %v1000
    %v1179 = vunpack.c.l.b16 %v1001
    %v1180 = vunpack.c.h.b16 %v1001
    %v1181 = vunpack.c.l.b16 %v1002
    %v1182 = vunpack.c.h.b16 %v1002
    %v1183 = vunpack.c.l.b16 %v1003
    %v1184 = vunpack.c.h.b16 %v1003
    %v1185 = vunpack.c.l.b16 %v1004
    %v1186 = vunpack.c.h.b16 %v1004
    %v1187 = vunpack.c.l.b16 %v1005
    %v1188 = vunpack.c.h.b16 %v1005
    %v1189 = vunpack.c.l.b16 %v1006
    %v1190 = vunpack.c.h.b16 %v1006
    %v1191 = vunpack.c.l.b16 %v1007
    %v1192 = vunpack.c.h.b16 %v1007
    %v1193 = vpack.c.b16 %v1163, %v1161
    %v1194 = vpack.c.b16 %v1164, %v1162
    %v1195 = vpack.c.b16 %v1167, %v1165
    %v1196 = vpack.c.b16 %v1168, %v1166
    %v1197 = vpack.c.b16 %v1171, %v1169
    %v1198 = vpack.c.b16 %v1172, %v1170
    %v1199 = vpack.c.b16 %v1175, %v1173
    %v1200 = vpack.c.b16 %v1176, %v1174
    %v1201 = vpack.c.b16 %v1179, %v1177
    %v1202 = vpack.c.b16 %v1180, %v1178
    %v1203 = vpack.c.b16 %v1183, %v1181
    %v1204 = vpack.c.b16 %v1184, %v1182
    %v1205 = vpack.c.b16 %v1187, %v1185
    %v1206 = vpack.c.b16 %v1188, %v1186
    %v1207 = vpack.c.b16 %v1191, %v1189
    %v1208 = vpack.c.b16 %v1192, %v1190
    %1225 = vmatpush.bf16.msra.mxu0 %v1207
    %1226 = vmatpush.bf16.msra.mxu0 %v1205
    %1227 = vmatpush.bf16.msra.mxu0 %v1203
    %1228 = vmatpush.bf16.msra.mxu0 %v1201
    %1229 = vmatpush.bf16.msra.mxu0 %v1199
    %1230 = vmatpush.bf16.msra.mxu0 %v1197
    %1231 = vmatpush.bf16.msra.mxu0 %v1195
    %1232 = vmatpush.bf16.msra.mxu0 %v1193
    %1233 = vmatmul.bf16.gmra.mxu0 %v1009
    %v1234 = vpop.f32.mrf.mxu0
    %v1235 = vadd.f32 0.0, %v1234
    %v1236 = vpop.f32.mrf.mxu0
    %1237 = vdwg.mxu0
    %1238 = vmatpush.bf16.msra.mxu0 %v1208
    %1239 = vmatpush.bf16.msra.mxu0 %v1206
    %1240 = vmatpush.bf16.msra.mxu0 %v1204
    %1241 = vmatpush.bf16.msra.mxu0 %v1202
    %1242 = vmatpush.bf16.msra.mxu0 %v1200
    %1243 = vmatpush.bf16.msra.mxu0 %v1198
    %1244 = vmatpush.bf16.msra.mxu0 %v1196
    %1245 = vmatpush.bf16.msra.mxu0 %v1194
    %1246 = vmatmul.bf16.gmra.mxu0 %v1009
    %v1247 = vpop.f32.mrf.mxu0
    %v1248 = vadd.f32 0.0, %v1247
    %v1249 = vpop.f32.mrf.mxu0
    %1250 = vdwg.mxu0
    %v1251 = vadd.f32 %v1129, %v1235
    %v1252 = vadd.f32 %v1142, %v1248
    %v1254 = vperm.slane %v1008, 0
    %v1255 = vperm.slane %v1008, 1
    %v1258 = vadd.f32 %v1251, %v1254
    %v1259 = vadd.f32 %v1252, %v1255
    %v1260 = vmax.f32 %v1258, 0.0
    %v1261 = vmax.f32 %v1259, 0.0
    %v1262 = vld [vmem:[#allocation20] sm:$0xf]
    %v1263 = vld [vmem:[#allocation20 + $0x4] sm:$0xf]
    %v1264 = vld [vmem:[#allocation20 + $0x8] sm:$0xf]
    %v1265 = vld [vmem:[#allocation20 + $0xc] sm:$0xf]
    %v1266 = vld [vmem:[#allocation20 + $0x10] sm:$0xf]
    %v1267 = vld [vmem:[#allocation20 + $0x14] sm:$0xf]
    %v1268 = vld [vmem:[#allocation20 + $0x18] sm:$0xf]
    %v1269 = vld [vmem:[#allocation20 + $0x1c] sm:$0xf]
    %v1270 = vld [vmem:[#allocation20 + $0x20] sm:$0xf]
    %v1271 = vld [vmem:[#allocation20 + $0x24] sm:$0xf]
    %v1272 = vld [vmem:[#allocation20 + $0x28] sm:$0xf]
    %v1273 = vld [vmem:[#allocation20 + $0x2c] sm:$0xf]
    %v1274 = vld [vmem:[#allocation20 + $0x30] sm:$0xf]
    %v1275 = vld [vmem:[#allocation20 + $0x34] sm:$0xf]
    %v1276 = vld [vmem:[#allocation20 + $0x38] sm:$0xf]
    %v1277 = vld [vmem:[#allocation20 + $0x3c] sm:$0xf]
    %v1278 = vld [vmem:[#allocation20 + $0x40] sm:$0xf]
    %v1279 = vld [vmem:[#allocation20 + $0x44] sm:$0xf]
    %v1280 = vld [vmem:[#allocation20 + $0x48] sm:$0xf]
    %v1281 = vld [vmem:[#allocation20 + $0x4c] sm:$0xf]
    %v1282 = vld [vmem:[#allocation20 + $0x50] sm:$0xf]
    %v1283 = vld [vmem:[#allocation20 + $0x54] sm:$0xf]
    %v1284 = vld [vmem:[#allocation20 + $0x58] sm:$0xf]
    %v1285 = vld [vmem:[#allocation20 + $0x5c] sm:$0xf]
    %v1286 = vld [vmem:[#allocation20 + $0x60] sm:$0xf]
    %v1287 = vld [vmem:[#allocation20 + $0x64] sm:$0xf]
    %v1288 = vld [vmem:[#allocation20 + $0x68] sm:$0xf]
    %v1289 = vld [vmem:[#allocation20 + $0x6c] sm:$0xf]
    %v1290 = vld [vmem:[#allocation20 + $0x70] sm:$0xf]
    %v1291 = vld [vmem:[#allocation20 + $0x74] sm:$0xf]
    %v1292 = vld [vmem:[#allocation20 + $0x78] sm:$0xf]
    %v1293 = vld [vmem:[#allocation20 + $0x7c] sm:$0xf]
    %v1294 = vld [vmem:[#allocation22] sm:$0xf]
    %v1295 = vld [vmem:[#allocation22 + $0x4] sm:$0xf]
    %v1296 = vld [vmem:[#allocation22 + $0x8] sm:$0xf]
    %v1297 = vld [vmem:[#allocation22 + $0xc] sm:$0xf]
    %v1298 = vld [vmem:[#allocation22 + $0x10] sm:$0xf]
    %v1299 = vld [vmem:[#allocation22 + $0x14] sm:$0xf]
    %v1300 = vld [vmem:[#allocation22 + $0x18] sm:$0xf]
    %v1301 = vld [vmem:[#allocation22 + $0x1c] sm:$0xf]
    %v1302 = vld [vmem:[#allocation22 + $0x20] sm:$0xf]
    %v1303 = vld [vmem:[#allocation22 + $0x24] sm:$0xf]
    %v1304 = vld [vmem:[#allocation22 + $0x28] sm:$0xf]
    %v1305 = vld [vmem:[#allocation22 + $0x2c] sm:$0xf]
    %v1306 = vld [vmem:[#allocation22 + $0x30] sm:$0xf]
    %v1307 = vld [vmem:[#allocation22 + $0x34] sm:$0xf]
    %v1308 = vld [vmem:[#allocation22 + $0x38] sm:$0xf]
    %v1309 = vld [vmem:[#allocation22 + $0x3c] sm:$0xf]
    %v1310 = vld [vmem:[#allocation22 + $0x40] sm:$0xf]
    %v1311 = vld [vmem:[#allocation22 + $0x44] sm:$0xf]
    %v1312 = vld [vmem:[#allocation22 + $0x48] sm:$0xf]
    %v1313 = vld [vmem:[#allocation22 + $0x4c] sm:$0xf]
    %v1314 = vld [vmem:[#allocation22 + $0x50] sm:$0xf]
    %v1315 = vld [vmem:[#allocation22 + $0x54] sm:$0xf]
    %v1316 = vld [vmem:[#allocation22 + $0x58] sm:$0xf]
    %v1317 = vld [vmem:[#allocation22 + $0x5c] sm:$0xf]
    %v1318 = vld [vmem:[#allocation22 + $0x60] sm:$0xf]
    %v1319 = vld [vmem:[#allocation22 + $0x64] sm:$0xf]
    %v1320 = vld [vmem:[#allocation22 + $0x68] sm:$0xf]
    %v1321 = vld [vmem:[#allocation22 + $0x6c] sm:$0xf]
    %v1322 = vld [vmem:[#allocation22 + $0x70] sm:$0xf]
    %v1323 = vld [vmem:[#allocation22 + $0x74] sm:$0xf]
    %v1324 = vld [vmem:[#allocation22 + $0x78] sm:$0xf]
    %v1325 = vld [vmem:[#allocation22 + $0x7c] sm:$0xf]
    %v1326 = vld [vmem:[%s18] sm:$0x1]
    %v1327 = vpack.c.bf16 %v1261, %v1260
    %v1328 = vunpack.c.l.bf16 %v1327
    %v1329 = vunpack.c.h.bf16 %v1327
    %v1330 = vsub.f32 %v1260, %v1328
    %v1331 = vsub.f32 %v1261, %v1329
    %v1332 = vpack.c.bf16 %v1330, %v1330
    %v1333 = vpack.c.bf16 %v1331, %v1331
    %v1366 = vunpack.c.l.b16 %v1262
    %v1367 = vunpack.c.l.b16 %v1263
    %v1368 = vunpack.c.l.b16 %v1264
    %v1369 = vunpack.c.l.b16 %v1265
    %v1370 = vunpack.c.l.b16 %v1266
    %v1371 = vunpack.c.l.b16 %v1267
    %v1372 = vunpack.c.l.b16 %v1268
    %v1373 = vunpack.c.l.b16 %v1269
    %v1374 = vunpack.c.l.b16 %v1270
    %v1375 = vunpack.c.l.b16 %v1271
    %v1376 = vunpack.c.l.b16 %v1272
    %v1377 = vunpack.c.l.b16 %v1273
    %v1378 = vunpack.c.l.b16 %v1274
    %v1379 = vunpack.c.l.b16 %v1275
    %v1380 = vunpack.c.l.b16 %v1276
    %v1381 = vunpack.c.l.b16 %v1277
    %v1382 = vunpack.c.l.b16 %v1278
    %v1383 = vunpack.c.l.b16 %v1279
    %v1384 = vunpack.c.l.b16 %v1280
    %v1385 = vunpack.c.l.b16 %v1281
    %v1386 = vunpack.c.l.b16 %v1282
    %v1387 = vunpack.c.l.b16 %v1283
    %v1388 = vunpack.c.l.b16 %v1284
    %v1389 = vunpack.c.l.b16 %v1285
    %v1390 = vunpack.c.l.b16 %v1286
    %v1391 = vunpack.c.l.b16 %v1287
    %v1392 = vunpack.c.l.b16 %v1288
    %v1393 = vunpack.c.l.b16 %v1289
    %v1394 = vunpack.c.l.b16 %v1290
    %v1395 = vunpack.c.l.b16 %v1291
    %v1396 = vunpack.c.l.b16 %v1292
    %v1397 = vunpack.c.l.b16 %v1293
    %v1398 = vpack.c.b16 %v1367, %v1366
    %v1399 = vpack.c.b16 %v1369, %v1368
    %v1400 = vpack.c.b16 %v1371, %v1370
    %v1401 = vpack.c.b16 %v1373, %v1372
    %v1402 = vpack.c.b16 %v1375, %v1374
    %v1403 = vpack.c.b16 %v1377, %v1376
    %v1404 = vpack.c.b16 %v1379, %v1378
    %v1405 = vpack.c.b16 %v1381, %v1380
    %v1406 = vpack.c.b16 %v1383, %v1382
    %v1407 = vpack.c.b16 %v1385, %v1384
    %v1408 = vpack.c.b16 %v1387, %v1386
    %v1409 = vpack.c.b16 %v1389, %v1388
    %v1410 = vpack.c.b16 %v1391, %v1390
    %v1411 = vpack.c.b16 %v1393, %v1392
    %v1412 = vpack.c.b16 %v1395, %v1394
    %v1413 = vpack.c.b16 %v1397, %v1396
    %1430 = vmatpush.bf16.msra.mxu0 %v1405
    %1431 = vmatpush.bf16.msra.mxu0 %v1404
    %1432 = vmatpush.bf16.msra.mxu0 %v1403
    %1433 = vmatpush.bf16.msra.mxu0 %v1402
    %1434 = vmatpush.bf16.msra.mxu0 %v1401
    %1435 = vmatpush.bf16.msra.mxu0 %v1400
    %1436 = vmatpush.bf16.msra.mxu0 %v1399
    %1437 = vmatpush.bf16.msra.mxu0 %v1398
    %1438 = vmatmul.bf16.gmra.mxu0 %v1332
    %v1439 = vpop.f32.mrf.mxu0
    %v1440 = vadd.f32 0.0, %v1439
    %v1441 = vpop.f32.mrf.mxu0
    %1442 = vdwg.mxu0
    %1443 = vmatpush.bf16.msra.mxu0 %v1413
    %1444 = vmatpush.bf16.msra.mxu0 %v1412
    %1445 = vmatpush.bf16.msra.mxu0 %v1411
    %1446 = vmatpush.bf16.msra.mxu0 %v1410
    %1447 = vmatpush.bf16.msra.mxu0 %v1409
    %1448 = vmatpush.bf16.msra.mxu0 %v1408
    %1449 = vmatpush.bf16.msra.mxu0 %v1407
    %1450 = vmatpush.bf16.msra.mxu0 %v1406
    %1451 = vmatmul.bf16.gmra.mxu0 %v1333
    %v1452 = vpop.f32.mrf.mxu0
    %v1453 = vadd.f32 %v1440, %v1452
    %v1454 = vpop.f32.mrf.mxu0
    %1455 = vdwg.mxu0
    %v1457 = vunpack.c.l.b16 %v1327
    %v1458 = vunpack.c.h.b16 %v1327
    %v1459 = vpack.c.b16 %v1457, %v1457
    %v1460 = vpack.c.b16 %v1458, %v1458
    %1463 = vmatpush.bf16.msra.mxu0 %v1405
    %1464 = vmatpush.bf16.msra.mxu0 %v1404
    %1465 = vmatpush.bf16.msra.mxu0 %v1403
    %1466 = vmatpush.bf16.msra.mxu0 %v1402
    %1467 = vmatpush.bf16.msra.mxu0 %v1401
    %1468 = vmatpush.bf16.msra.mxu0 %v1400
    %1469 = vmatpush.bf16.msra.mxu0 %v1399
    %1470 = vmatpush.bf16.msra.mxu0 %v1398
    %1471 = vmatmul.bf16.gmra.mxu0 %v1459
    %v1472 = vpop.f32.mrf.mxu0
    %v1473 = vadd.f32 %v1453, %v1472
    %v1474 = vpop.f32.mrf.mxu0
    %1475 = vdwg.mxu0
    %1476 = vmatpush.bf16.msra.mxu0 %v1413
    %1477 = vmatpush.bf16.msra.mxu0 %v1412
    %1478 = vmatpush.bf16.msra.mxu0 %v1411
    %1479 = vmatpush.bf16.msra.mxu0 %v1410
    %1480 = vmatpush.bf16.msra.mxu0 %v1409
    %1481 = vmatpush.bf16.msra.mxu0 %v1408
    %1482 = vmatpush.bf16.msra.mxu0 %v1407
    %1483 = vmatpush.bf16.msra.mxu0 %v1406
    %1484 = vmatmul.bf16.gmra.mxu0 %v1460
    %v1485 = vpop.f32.mrf.mxu0
    %v1486 = vadd.f32 %v1473, %v1485
    %v1487 = vpop.f32.mrf.mxu0
    %1488 = vdwg.mxu0
    %v1521 = vunpack.c.l.b16 %v1294
    %v1522 = vunpack.c.l.b16 %v1295
    %v1523 = vunpack.c.l.b16 %v1296
    %v1524 = vunpack.c.l.b16 %v1297
    %v1525 = vunpack.c.l.b16 %v1298
    %v1526 = vunpack.c.l.b16 %v1299
    %v1527 = vunpack.c.l.b16 %v1300
    %v1528 = vunpack.c.l.b16 %v1301
    %v1529 = vunpack.c.l.b16 %v1302
    %v1530 = vunpack.c.l.b16 %v1303
    %v1531 = vunpack.c.l.b16 %v1304
    %v1532 = vunpack.c.l.b16 %v1305
    %v1533 = vunpack.c.l.b16 %v1306
    %v1534 = vunpack.c.l.b16 %v1307
    %v1535 = vunpack.c.l.b16 %v1308
    %v1536 = vunpack.c.l.b16 %v1309
    %v1537 = vunpack.c.l.b16 %v1310
    %v1538 = vunpack.c.l.b16 %v1311
    %v1539 = vunpack.c.l.b16 %v1312
    %v1540 = vunpack.c.l.b16 %v1313
    %v1541 = vunpack.c.l.b16 %v1314
    %v1542 = vunpack.c.l.b16 %v1315
    %v1543 = vunpack.c.l.b16 %v1316
    %v1544 = vunpack.c.l.b16 %v1317
    %v1545 = vunpack.c.l.b16 %v1318
    %v1546 = vunpack.c.l.b16 %v1319
    %v1547 = vunpack.c.l.b16 %v1320
    %v1548 = vunpack.c.l.b16 %v1321
    %v1549 = vunpack.c.l.b16 %v1322
    %v1550 = vunpack.c.l.b16 %v1323
    %v1551 = vunpack.c.l.b16 %v1324
    %v1552 = vunpack.c.l.b16 %v1325
    %v1553 = vpack.c.b16 %v1522, %v1521
    %v1554 = vpack.c.b16 %v1524, %v1523
    %v1555 = vpack.c.b16 %v1526, %v1525
    %v1556 = vpack.c.b16 %v1528, %v1527
    %v1557 = vpack.c.b16 %v1530, %v1529
    %v1558 = vpack.c.b16 %v1532, %v1531
    %v1559 = vpack.c.b16 %v1534, %v1533
    %v1560 = vpack.c.b16 %v1536, %v1535
    %v1561 = vpack.c.b16 %v1538, %v1537
    %v1562 = vpack.c.b16 %v1540, %v1539
    %v1563 = vpack.c.b16 %v1542, %v1541
    %v1564 = vpack.c.b16 %v1544, %v1543
    %v1565 = vpack.c.b16 %v1546, %v1545
    %v1566 = vpack.c.b16 %v1548, %v1547
    %v1567 = vpack.c.b16 %v1550, %v1549
    %v1568 = vpack.c.b16 %v1552, %v1551
    %1585 = vmatpush.bf16.msra.mxu0 %v1560
    %1586 = vmatpush.bf16.msra.mxu0 %v1559
    %1587 = vmatpush.bf16.msra.mxu0 %v1558
    %1588 = vmatpush.bf16.msra.mxu0 %v1557
    %1589 = vmatpush.bf16.msra.mxu0 %v1556
    %1590 = vmatpush.bf16.msra.mxu0 %v1555
    %1591 = vmatpush.bf16.msra.mxu0 %v1554
    %1592 = vmatpush.bf16.msra.mxu0 %v1553
    %1593 = vmatmul.bf16.gmra.mxu0 %v1459
    %v1594 = vpop.f32.mrf.mxu0
    %v1595 = vadd.f32 0.0, %v1594
    %v1596 = vpop.f32.mrf.mxu0
    %1597 = vdwg.mxu0
    %1598 = vmatpush.bf16.msra.mxu0 %v1568
    %1599 = vmatpush.bf16.msra.mxu0 %v1567
    %1600 = vmatpush.bf16.msra.mxu0 %v1566
    %1601 = vmatpush.bf16.msra.mxu0 %v1565
    %1602 = vmatpush.bf16.msra.mxu0 %v1564
    %1603 = vmatpush.bf16.msra.mxu0 %v1563
    %1604 = vmatpush.bf16.msra.mxu0 %v1562
    %1605 = vmatpush.bf16.msra.mxu0 %v1561
    %1606 = vmatmul.bf16.gmra.mxu0 %v1460
    %v1607 = vpop.f32.mrf.mxu0
    %v1608 = vadd.f32 %v1595, %v1607
    %v1609 = vpop.f32.mrf.mxu0
    %1610 = vdwg.mxu0
    %v1611 = vadd.f32 %v1486, %v1608
    %v1613 = vperm.slane %v1326, 0
    %v1615 = vadd.f32 %v1611, %v1613
    %v1616 = vtanh.pop %v1615
    %1617 = vst [vmem:[#allocation23] sm:$0xff] %v1616
    // Predicated region
    $region130: #{tpu_custom_call.1} parent=1 // pred_check
      _
    $region131: #{tpu_custom_call.1} parent=1 // pred_check_branch
      %1619 = sbr.rel (0) target = $region133
    $region132: #{tpu_custom_call.1} parent=1 // pred_region
      %1621 = vsyncadd [#allocation4], 0
      %s1623 = sshll.u32 [#allocation23], 4
      %s1624 = int_to_ptr.vmem [resolvable:$true] %s1623
      %s1625 = sshll.u32 %s19, 4
      %s1626 = int_to_ptr.hbm [resolvable:$true] %s1625
      %1628 = dma.vmem_to_hbm [thread:$0]  %s1624, 128, %s1626, [#allocation4]
    $region133: #{tpu_custom_call.1} parent=1 // pred_fallthru
      _
    // Predicated region
    $region134: #{tpu_custom_call.1} parent=1 // pred_check
      _
    $region135: #{tpu_custom_call.1} parent=1 // pred_check_branch
      %1630 = sbr.rel (0) target = $region137
    $region136: #{tpu_custom_call.1} parent=1 // pred_region
      %1632 = dma.done [#allocation4], 128
    $region137: #{tpu_custom_call.1} parent=1 // pred_fallthru
      _
    %1633 = vsyncpa [#allocation3], 1
    %1634 = vsyncpa [#allocation6], 1
    %1635 = vsyncpa [#allocation9], 1
    %1636 = vsyncpa [#allocation12], 1
    %1637 = vsyncpa [#allocation15], 1
    %1638 = vsyncpa [#allocation18], 1
    %1639 = vsyncpa [#allocation21], 1
    %1640 = vsyncpa [#allocation4], 1

</llo_original>
